<compile_context>
chip_gen: v7x
topology: tpu7x:2x2x1
jax: 0.10.0
libtpu: 0.0.40
codegen_flags: <defaults>
</compile_context>

<pallas_src>
import functools
import jax
import jax.numpy as jnp
from jax.experimental import pallas as pl
from jax.experimental.pallas import tpu as pltpu

EPS = 1e-6


def _layernorm(x, g, b):
    mu = jnp.mean(x, axis=-1, keepdims=True)
    xc = x - mu
    var = jnp.mean(xc * xc, axis=-1, keepdims=True)
    inv = jax.lax.rsqrt(var + EPS)
    return xc * inv * g + b


def _gelu(x):
    # TODO(synk): PyTorch nn.GELU defaults to exact erf; tanh approximation is
    # used here since erf lowering on Mosaic is not guaranteed.
    c = 0.7978845608028654  # sqrt(2/pi)
    return 0.5 * x * (1.0 + jnp.tanh(c * (x + 0.044715 * x * x * x)))


def _encoder_kernel(num_heads,
                    x_in_ref, ct_in_ref,
                    ln1_g_ref, ln1_b_ref,
                    wq_ref, wk_ref, wv_ref, bq_ref, bk_ref, bv_ref,
                    wo_ref, bo_ref,
                    e_ref, et_ref,
                    ln2_g_ref, ln2_b_ref,
                    w1_ref, b1_ref, w2_ref, b2_ref,
                    lnf_g_ref, lnf_b_ref,
                    x_out_ref, ct_out_ref):
    """One (batch b, layer l) grid step of the whole Encoder.

    x_out_ref / ct_out_ref are resident across the layer axis (their block
    index is constant over l), so they carry the activations from layer to
    layer entirely in VMEM.
    """
    l = pl.program_id(1)
    last = pl.num_programs(1) - 1

    # Initialize the resident activation blocks from the (pos-embedded) inputs.
    @pl.when(l == 0)
    def _():
        x_out_ref[...] = x_in_ref[...]
        ct_out_ref[...] = ct_in_ref[...]

    x = x_out_ref[0]            # (S, D)  f32
    ct = ct_out_ref[0]          # (1, D)  f32
    D = x.shape[-1]
    dh = D // num_heads
    scale = 1.0 / (dh ** 0.5)

    ln1_g = ln1_g_ref[0]
    ln1_b = ln1_b_ref[0]

    # ln_1 applied to both kv (patch tokens) and q (class token)  -- f32 math
    kv = _layernorm(x, ln1_g, ln1_b)          # (S, D)
    q_ln = _layernorm(ct, ln1_g, ln1_b)       # (1, D)

    # qkv projections: bf16 operands, f32 accumulation (weights stored bf16).
    kv_bf = kv.astype(jnp.bfloat16)
    q_bf = q_ln.astype(jnp.bfloat16)
    q = jnp.dot(q_bf, wq_ref[0], preferred_element_type=jnp.float32) + bq_ref[0]   # (1, D)
    k = jnp.dot(kv_bf, wk_ref[0], preferred_element_type=jnp.float32) + bk_ref[0]  # (S, D)
    v = jnp.dot(kv_bf, wv_ref[0], preferred_element_type=jnp.float32) + bv_ref[0]  # (S, D)

    # Multi-head attention with a length-1 query, no per-head reshapes:
    # scores[s, h] = sum_{d in head h} (q*scale)[d] * k[s, d]  == (k * q) @ E
    qs = q * scale
    prod = k * qs                                               # (S, D)
    scores = jnp.dot(prod, e_ref[...],
                     preferred_element_type=jnp.float32)        # (S, H)
    scores = scores - jnp.max(scores, axis=0, keepdims=True)
    p = jnp.exp(scores)
    denom = jnp.sum(p, axis=0, keepdims=True)
    p = p * pl.reciprocal(denom, approx=True)                   # softmax over keys S
    # out[h*dh + d] = sum_s p[s, h] * v[s, h*dh + d]
    pe = jnp.dot(p, et_ref[...],
                 preferred_element_type=jnp.float32)            # (S, D)
    attn = jnp.sum(v * pe, axis=0, keepdims=True)               # (1, D)
    attn = jnp.dot(attn.astype(jnp.bfloat16), wo_ref[0],
                   preferred_element_type=jnp.float32) + bo_ref[0]

    # class_token = class_token + drop_path(dropout(q))   (identities at eval)
    ct_new = ct + attn

    # input = drop_path(dropout(mlp(ln_2(input)))) + input
    x2 = _layernorm(x, ln2_g_ref[0], ln2_b_ref[0])
    h1 = jnp.dot(x2.astype(jnp.bfloat16), w1_ref[0],
                 preferred_element_type=jnp.float32) + b1_ref[0]
    h1 = _gelu(h1)
    m = jnp.dot(h1.astype(jnp.bfloat16), w2_ref[0],
                preferred_element_type=jnp.float32) + b2_ref[0]
    x_out_ref[0] = x + m

    # Fused final LayerNorm on the class token at the last layer.
    ct_final = _layernorm(ct_new, lnf_g_ref[...], lnf_b_ref[...])
    ct_out_ref[0] = jnp.where(l == last, ct_final, ct_new)


def encoder_forward(x, class_token, params, num_heads):
    """Encoder.forward with get_additional_outputs=False, layer_outputs=[]."""
    pos = params["pos_embedding"]                 # (1, seq_length, D)
    x = x + pos[:, 1:]                            # glue: elementwise add
    class_token = class_token + pos[:, :1]

    B, S, D = x.shape
    L = params["wq"].shape[0]
    M = params["w1"].shape[-1]
    H = num_heads

    def per_layer(shape):
        # stacked (L, *shape) parameter, one layer-slice per grid step
        return pl.BlockSpec((1,) + shape, lambda b, l: (l,) + (0,) * len(shape))

    def const(shape):
        # shared across all grid steps (fetched once)
        return pl.BlockSpec(shape, lambda b, l: (0,) * len(shape))

    in_specs = [
        pl.BlockSpec((1, S, D), lambda b, l: (b, 0, 0)),    # x (read at l==0)
        pl.BlockSpec((1, 1, D), lambda b, l: (b, 0, 0)),    # class token
        per_layer((1, D)), per_layer((1, D)),               # ln1 gamma/beta
        per_layer((D, D)), per_layer((D, D)), per_layer((D, D)),   # wq, wk, wv
        per_layer((1, D)), per_layer((1, D)), per_layer((1, D)),   # bq, bk, bv
        per_layer((D, D)), per_layer((1, D)),               # wo, bo
        const((D, H)), const((H, D)),                       # E, E^T (shared)
        per_layer((1, D)), per_layer((1, D)),               # ln2 gamma/beta
        per_layer((D, M)), per_layer((1, M)),               # mlp w1, b1
        per_layer((M, D)), per_layer((1, D)),               # mlp w2, b2
        const((1, D)), const((1, D)),                       # final ln gamma/beta
    ]
    out_specs = (
        pl.BlockSpec((1, S, D), lambda b, l: (b, 0, 0)),    # resident over l
        pl.BlockSpec((1, 1, D), lambda b, l: (b, 0, 0)),    # resident over l
    )
    kernel = functools.partial(_encoder_kernel, num_heads)
    return pl.pallas_call(
        kernel,
        out_shape=(jax.ShapeDtypeStruct((B, S, D), jnp.float32),
                   jax.ShapeDtypeStruct((B, 1, D), jnp.float32)),
        grid=(B, L),
        in_specs=in_specs,
        out_specs=out_specs,
        compiler_params=pltpu.CompilerParams(
            dimension_semantics=("parallel", "arbitrary"),
            vmem_limit_bytes=48 * 1024 * 1024),
    )(x, class_token,
      params["ln1_g"], params["ln1_b"],
      params["wq"], params["wk"], params["wv"],
      params["bq"], params["bk"], params["bv"],
      params["wo"], params["bo"],
      params["E"], params["ET"],
      params["ln2_g"], params["ln2_b"],
      params["w1"], params["b1"], params["w2"], params["b2"],
      params["lnf_g"], params["lnf_b"])


def init_params(key, seq_length, num_layers, num_heads, hidden_dim, mlp_ratio):
    """Deterministic synthetic parameters.  Linear weights are stored already
    transposed to (in, out) (PyTorch stores (out, in)), stacked over layers,
    and kept in bf16 (matmul operands); biases / LN params / pos in f32."""
    D = hidden_dim
    M = int(mlp_ratio * D)
    L = num_layers
    dh = D // num_heads
    d_idx = jnp.arange(D)[:, None]
    h_idx = jnp.arange(num_heads)[None, :]
    E = (d_idx // dh == h_idx).astype(jnp.float32)          # (D, H)

    k = jax.random.split(key, 13)
    s = 0.02
    pos = s * jax.random.normal(k[0], (1, seq_length, D), jnp.float32)

    def w_bf16(kk, shape):
        return (s * jax.random.normal(kk, shape, jnp.float32)).astype(jnp.bfloat16)

    def b_f32(kk, shape):
        return s * jax.random.normal(kk, shape, jnp.float32)

    return dict(
        pos_embedding=pos,
        ln1_g=jnp.ones((L, 1, D), jnp.float32),
        ln1_b=jnp.zeros((L, 1, D), jnp.float32),
        wq=w_bf16(k[1], (L, D, D)),
        wk=w_bf16(k[2], (L, D, D)),
        wv=w_bf16(k[3], (L, D, D)),
        bq=b_f32(k[4], (L, 1, D)),
        bk=b_f32(k[5], (L, 1, D)),
        bv=b_f32(k[6], (L, 1, D)),
        wo=w_bf16(k[7], (L, D, D)),
        bo=b_f32(k[8], (L, 1, D)),
        E=E, ET=E.T,
        ln2_g=jnp.ones((L, 1, D), jnp.float32),
        ln2_b=jnp.zeros((L, 1, D), jnp.float32),
        w1=w_bf16(k[9], (L, D, M)),
        b1=b_f32(k[10], (L, 1, M)),
        w2=w_bf16(k[11], (L, M, D)),
        b2=b_f32(k[12], (L, 1, D)),
        lnf_g=jnp.ones((1, D), jnp.float32),
        lnf_b=jnp.zeros((1, D), jnp.float32),
    )


# ---------- pure-JAX reference (for a sanity check) ----------
def _ref_ln(x, g, b):
    mu = x.mean(-1, keepdims=True)
    var = ((x - mu) ** 2).mean(-1, keepdims=True)
    return (x - mu) / jnp.sqrt(var + EPS) * g + b


def _ref_forward(x, ct, params, num_heads):
    pos = params["pos_embedding"]
    x = x + pos[:, 1:]
    ct = ct + pos[:, :1]
    B, S, D = x.shape
    H = num_heads
    dh = D // H
    L = params["wq"].shape[0]

    def mm(a, w):   # bf16 operands, f32 accumulation (matches kernel)
        return jnp.dot(a.astype(jnp.bfloat16), w, preferred_element_type=jnp.float32)

    for i in range(L):
        kv = _ref_ln(x, params["ln1_g"][i], params["ln1_b"][i])
        ql = _ref_ln(ct, params["ln1_g"][i], params["ln1_b"][i])
        q = (mm(ql, params["wq"][i]) + params["bq"][i]).reshape(B, 1, H, dh)
        k = (mm(kv, params["wk"][i]) + params["bk"][i]).reshape(B, S, H, dh)
        v = (mm(kv, params["wv"][i]) + params["bv"][i]).reshape(B, S, H, dh)
        sc = jnp.einsum("bqhd,bkhd->bhqk", q, k) / jnp.sqrt(dh)
        a = jax.nn.softmax(sc, axis=-1)
        o = jnp.einsum("bhqk,bkhd->bqhd", a, v).reshape(B, 1, D)
        ct = ct + (mm(o, params["wo"][i]) + params["bo"][i])
        x2 = _ref_ln(x, params["ln2_g"][i], params["ln2_b"][i])
        h = _gelu(mm(x2, params["w1"][i]) + params["b1"][i])
        x = x + (mm(h, params["w2"][i]) + params["b2"][i])
    ct = _ref_ln(ct, params["lnf_g"], params["lnf_b"])
    return x, ct


if __name__ == "__main__":
    key = jax.random.PRNGKey(0)
    B = 2
    seq_length = 9          # 1 class token + 8 patch tokens
    S = seq_length - 1
    D = 128                 # lane-dense hidden dim (multiple of 128)
    num_layers, num_heads, mlp_ratio = 3, 4, 4

    kx, kc, kp = jax.random.split(key, 3)
    x = jax.random.normal(kx, (B, S, D), jnp.float32)
    class_token = jax.random.normal(kc, (B, 1, D), jnp.float32)
    params = init_params(kp, seq_length, num_layers, num_heads, D, mlp_ratio)

    x_out, ct_out = encoder_forward(x, class_token, params, num_heads)
    jax.block_until_ready((x_out, ct_out))

    assert x_out.shape == (B, S, D) and ct_out.shape == (B, 1, D)
    assert not bool(jnp.any(jnp.isnan(x_out))) and not bool(jnp.any(jnp.isnan(ct_out)))

    x_ref, ct_ref = _ref_forward(x, class_token, params, num_heads)
    assert jnp.allclose(x_out, x_ref, atol=2e-2, rtol=2e-2)
    assert jnp.allclose(ct_out, ct_ref, atol=2e-2, rtol=2e-2)

    print("KERNEL_OK")
</pallas_src>

<mosaic_0001>
module attributes {stable_mosaic.version = 11 : i64} {
  func.func @_encoder_kernel(%arg0: i32, %arg1: i32, %arg2: memref<1x8x128xf32, #tpu.memory_space<vmem>>, %arg3: memref<1x1x128xf32, #tpu.memory_space<vmem>>, %arg4: memref<1x1x128xf32, #tpu.memory_space<vmem>>, %arg5: memref<1x1x128xf32, #tpu.memory_space<vmem>>, %arg6: memref<1x128x128xbf16, #tpu.memory_space<vmem>>, %arg7: memref<1x128x128xbf16, #tpu.memory_space<vmem>>, %arg8: memref<1x128x128xbf16, #tpu.memory_space<vmem>>, %arg9: memref<1x1x128xf32, #tpu.memory_space<vmem>>, %arg10: memref<1x1x128xf32, #tpu.memory_space<vmem>>, %arg11: memref<1x1x128xf32, #tpu.memory_space<vmem>>, %arg12: memref<1x128x128xbf16, #tpu.memory_space<vmem>>, %arg13: memref<1x1x128xf32, #tpu.memory_space<vmem>>, %arg14: memref<128x4xf32, #tpu.memory_space<vmem>>, %arg15: memref<4x128xf32, #tpu.memory_space<vmem>>, %arg16: memref<1x1x128xf32, #tpu.memory_space<vmem>>, %arg17: memref<1x1x128xf32, #tpu.memory_space<vmem>>, %arg18: memref<1x128x512xbf16, #tpu.memory_space<vmem>>, %arg19: memref<1x1x512xf32, #tpu.memory_space<vmem>>, %arg20: memref<1x512x128xbf16, #tpu.memory_space<vmem>>, %arg21: memref<1x1x128xf32, #tpu.memory_space<vmem>>, %arg22: memref<1x128xf32, #tpu.memory_space<vmem>>, %arg23: memref<1x128xf32, #tpu.memory_space<vmem>>, %arg24: memref<1x8x128xf32, #tpu.memory_space<vmem>>, %arg25: memref<1x1x128xf32, #tpu.memory_space<vmem>>) attributes {dimension_semantics = [#tpu.dimension_semantics<parallel>, #tpu.dimension_semantics<arbitrary>], iteration_bounds = array<i64: 2, 3>, scalar_prefetch = 0 : i64, scratch_operands = 0 : i64, tpu.core_type = #tpu.core_type<tc>, window_params = [{transform_indices = @transform_0, window_bounds = array<i64: 1, 8, 128>}, {transform_indices = @transform_1, window_bounds = array<i64: 1, 1, 128>}, {transform_indices = @transform_2, window_bounds = array<i64: 1, 1, 128>}, {transform_indices = @transform_3, window_bounds = array<i64: 1, 1, 128>}, {transform_indices = @transform_4, window_bounds = array<i64: 1, 128, 128>}, {transform_indices = @transform_5, window_bounds = array<i64: 1, 128, 128>}, {transform_indices = @transform_6, window_bounds = array<i64: 1, 128, 128>}, {transform_indices = @transform_7, window_bounds = array<i64: 1, 1, 128>}, {transform_indices = @transform_8, window_bounds = array<i64: 1, 1, 128>}, {transform_indices = @transform_9, window_bounds = array<i64: 1, 1, 128>}, {transform_indices = @transform_10, window_bounds = array<i64: 1, 128, 128>}, {transform_indices = @transform_11, window_bounds = array<i64: 1, 1, 128>}, {pipeline_mode = #tpu.pipeline_mode<synchronous>, transform_indices = @transform_12, window_bounds = array<i64: 128, 4>}, {pipeline_mode = #tpu.pipeline_mode<synchronous>, transform_indices = @transform_13, window_bounds = array<i64: 4, 128>}, {transform_indices = @transform_14, window_bounds = array<i64: 1, 1, 128>}, {transform_indices = @transform_15, window_bounds = array<i64: 1, 1, 128>}, {transform_indices = @transform_16, window_bounds = array<i64: 1, 128, 512>}, {transform_indices = @transform_17, window_bounds = array<i64: 1, 1, 512>}, {transform_indices = @transform_18, window_bounds = array<i64: 1, 512, 128>}, {transform_indices = @transform_19, window_bounds = array<i64: 1, 1, 128>}, {pipeline_mode = #tpu.pipeline_mode<synchronous>, transform_indices = @transform_20, window_bounds = array<i64: 1, 128>}, {pipeline_mode = #tpu.pipeline_mode<synchronous>, transform_indices = @transform_21, window_bounds = array<i64: 1, 128>}, {transform_indices = @transform_22, window_bounds = array<i64: 1, 8, 128>}, {transform_indices = @transform_23, window_bounds = array<i64: 1, 1, 128>}]} {
    %c0_i32 = arith.constant 0 : i32
    %0 = arith.cmpi eq, %arg1, %c0_i32 : i32
    %1 = arith.extui %0 : i1 to i32
    %c0_i32_0 = arith.constant 0 : i32
    %2 = arith.cmpi ne, %1, %c0_i32_0 : i32
    scf.if %2 {
      %c0_103 = arith.constant 0 : index
      %c0_104 = arith.constant 0 : index
      %c0_105 = arith.constant 0 : index
      %182 = vector.load %arg2[%c0_103, %c0_104, %c0_105] : memref<1x8x128xf32, #tpu.memory_space<vmem>>, vector<1x8x128xf32>
      %c0_106 = arith.constant 0 : index
      %c0_107 = arith.constant 0 : index
      %c0_108 = arith.constant 0 : index
      %183 = vector.load %arg24[%c0_106, %c0_107, %c0_108] : memref<1x8x128xf32, #tpu.memory_space<vmem>>, vector<1x8x128xf32>
      tpu.vector_store %arg24[%c0_106, %c0_107, %c0_108], %182 {strides = array<i32>} : memref<1x8x128xf32, #tpu.memory_space<vmem>>, vector<1x8x128xf32>,
      %c0_109 = arith.constant 0 : index
      %c0_110 = arith.constant 0 : index
      %c0_111 = arith.constant 0 : index
      %184 = vector.load %arg3[%c0_109, %c0_110, %c0_111] : memref<1x1x128xf32, #tpu.memory_space<vmem>>, vector<1x1x128xf32>
      %c0_112 = arith.constant 0 : index
      %c0_113 = arith.constant 0 : index
      %c0_114 = arith.constant 0 : index
      %185 = vector.load %arg25[%c0_112, %c0_113, %c0_114] : memref<1x1x128xf32, #tpu.memory_space<vmem>>, vector<1x1x128xf32>
      tpu.vector_store %arg25[%c0_112, %c0_113, %c0_114], %184 {strides = array<i32>} : memref<1x1x128xf32, #tpu.memory_space<vmem>>, vector<1x1x128xf32>,
    } else {
    }
    %c0 = arith.constant 0 : index
    %c0_1 = arith.constant 0 : index
    %c0_2 = arith.constant 0 : index
    %3 = vector.load %arg24[%c0, %c0_1, %c0_2] : memref<1x8x128xf32, #tpu.memory_space<vmem>>, vector<1x8x128xf32>
    %4 = vector.shape_cast %3 : vector<1x8x128xf32> to vector<8x128xf32>
    %c0_3 = arith.constant 0 : index
    %c0_4 = arith.constant 0 : index
    %c0_5 = arith.constant 0 : index
    %5 = vector.load %arg25[%c0_3, %c0_4, %c0_5] : memref<1x1x128xf32, #tpu.memory_space<vmem>>, vector<1x1x128xf32>
    %6 = vector.shape_cast %5 : vector<1x1x128xf32> to vector<1x128xf32>
    %c0_6 = arith.constant 0 : index
    %c0_7 = arith.constant 0 : index
    %c0_8 = arith.constant 0 : index
    %7 = vector.load %arg4[%c0_6, %c0_7, %c0_8] : memref<1x1x128xf32, #tpu.memory_space<vmem>>, vector<1x1x128xf32>
    %8 = vector.shape_cast %7 : vector<1x1x128xf32> to vector<1x128xf32>
    %c0_9 = arith.constant 0 : index
    %c0_10 = arith.constant 0 : index
    %c0_11 = arith.constant 0 : index
    %9 = vector.load %arg5[%c0_9, %c0_10, %c0_11] : memref<1x1x128xf32, #tpu.memory_space<vmem>>, vector<1x1x128xf32>
    %10 = vector.shape_cast %9 : vector<1x1x128xf32> to vector<1x128xf32>
    %cst = arith.constant dense<0.000000e+00> : vector<8xf32>
    %11 = vector.multi_reduction <add>, %4, %cst [1] : vector<8x128xf32> to vector<8xf32>
    %12 = vector.shape_cast %11 : vector<8xf32> to vector<8x1xf32>
    %cst_12 = arith.constant 1.280000e+02 : f32
    %13 = vector.broadcast %cst_12 : f32 to vector<8x1xf32>
    %14 = arith.divf %12, %13 : vector<8x1xf32>
    %15 = vector.broadcast %14 : vector<8x1xf32> to vector<8x128xf32>
    %16 = arith.subf %4, %15 : vector<8x128xf32>
    %17 = arith.mulf %16, %16 : vector<8x128xf32>
    %cst_13 = arith.constant dense<0.000000e+00> : vector<8xf32>
    %18 = vector.multi_reduction <add>, %17, %cst_13 [1] : vector<8x128xf32> to vector<8xf32>
    %19 = vector.shape_cast %18 : vector<8xf32> to vector<8x1xf32>
    %cst_14 = arith.constant 1.280000e+02 : f32
    %20 = vector.broadcast %cst_14 : f32 to vector<8x1xf32>
    %21 = arith.divf %19, %20 : vector<8x1xf32>
    %cst_15 = arith.constant 9.99999997E-7 : f32
    %22 = vector.broadcast %cst_15 : f32 to vector<8x1xf32>
    %23 = arith.addf %21, %22 : vector<8x1xf32>
    %24 = math.rsqrt %23 : vector<8x1xf32>
    %25 = vector.broadcast %24 : vector<8x1xf32> to vector<8x128xf32>
    %26 = arith.mulf %16, %25 : vector<8x128xf32>
    %27 = vector.broadcast %8 : vector<1x128xf32> to vector<8x128xf32>
    %28 = arith.mulf %26, %27 : vector<8x128xf32>
    %29 = vector.broadcast %10 : vector<1x128xf32> to vector<8x128xf32>
    %30 = arith.addf %28, %29 : vector<8x128xf32>
    %cst_16 = arith.constant dense<0.000000e+00> : vector<1xf32>
    %31 = vector.multi_reduction <add>, %6, %cst_16 [1] : vector<1x128xf32> to vector<1xf32>
    %32 = vector.shape_cast %31 : vector<1xf32> to vector<1x1xf32>
    %cst_17 = arith.constant 1.280000e+02 : f32
    %33 = vector.broadcast %cst_17 : f32 to vector<1x1xf32>
    %34 = arith.divf %32, %33 : vector<1x1xf32>
    %35 = vector.broadcast %34 : vector<1x1xf32> to vector<1x128xf32>
    %36 = arith.subf %6, %35 : vector<1x128xf32>
    %37 = arith.mulf %36, %36 : vector<1x128xf32>
    %cst_18 = arith.constant dense<0.000000e+00> : vector<1xf32>
    %38 = vector.multi_reduction <add>, %37, %cst_18 [1] : vector<1x128xf32> to vector<1xf32>
    %39 = vector.shape_cast %38 : vector<1xf32> to vector<1x1xf32>
    %cst_19 = arith.constant 1.280000e+02 : f32
    %40 = vector.broadcast %cst_19 : f32 to vector<1x1xf32>
    %41 = arith.divf %39, %40 : vector<1x1xf32>
    %cst_20 = arith.constant 9.99999997E-7 : f32
    %42 = vector.broadcast %cst_20 : f32 to vector<1x1xf32>
    %43 = arith.addf %41, %42 : vector<1x1xf32>
    %44 = math.rsqrt %43 : vector<1x1xf32>
    %45 = vector.broadcast %44 : vector<1x1xf32> to vector<1x128xf32>
    %46 = arith.mulf %36, %45 : vector<1x128xf32>
    %47 = arith.mulf %46, %8 : vector<1x128xf32>
    %48 = arith.addf %47, %10 : vector<1x128xf32>
    %49 = arith.truncf %30 : vector<8x128xf32> to vector<8x128xbf16>
    %50 = arith.truncf %48 : vector<1x128xf32> to vector<1x128xbf16>
    %c0_21 = arith.constant 0 : index
    %c0_22 = arith.constant 0 : index
    %c0_23 = arith.constant 0 : index
    %51 = vector.load %arg6[%c0_21, %c0_22, %c0_23] : memref<1x128x128xbf16, #tpu.memory_space<vmem>>, vector<1x128x128xbf16>
    %52 = vector.shape_cast %51 : vector<1x128x128xbf16> to vector<128x128xbf16>
    %cst_24 = arith.constant dense<0.000000e+00> : vector<1x128xf32>
    %53 = tpu.matmul %50, %52, %cst_24 {dimension_numbers = #tpu.dot_dimension_numbers<[1], [0], [0], [1], [0, 0, 1, 1], [], []>} : vector<1x128xbf16>, vector<128x128xbf16>, vector<1x128xf32> -> vector<1x128xf32>
    %c0_25 = arith.constant 0 : index
    %c0_26 = arith.constant 0 : index
    %c0_27 = arith.constant 0 : index
    %54 = vector.load %arg9[%c0_25, %c0_26, %c0_27] : memref<1x1x128xf32, #tpu.memory_space<vmem>>, vector<1x1x128xf32>
    %55 = vector.shape_cast %54 : vector<1x1x128xf32> to vector<1x128xf32>
    %56 = arith.addf %53, %55 : vector<1x128xf32>
    %c0_28 = arith.constant 0 : index
    %c0_29 = arith.constant 0 : index
    %c0_30 = arith.constant 0 : index
    %57 = vector.load %arg7[%c0_28, %c0_29, %c0_30] : memref<1x128x128xbf16, #tpu.memory_space<vmem>>, vector<1x128x128xbf16>
    %58 = vector.shape_cast %57 : vector<1x128x128xbf16> to vector<128x128xbf16>
    %cst_31 = arith.constant dense<0.000000e+00> : vector<8x128xf32>
    %59 = tpu.matmul %49, %58, %cst_31 {dimension_numbers = #tpu.dot_dimension_numbers<[1], [0], [0], [1], [0, 0, 1, 1], [], []>} : vector<8x128xbf16>, vector<128x128xbf16>, vector<8x128xf32> -> vector<8x128xf32>
    %c0_32 = arith.constant 0 : index
    %c0_33 = arith.constant 0 : index
    %c0_34 = arith.constant 0 : index
    %60 = vector.load %arg10[%c0_32, %c0_33, %c0_34] : memref<1x1x128xf32, #tpu.memory_space<vmem>>, vector<1x1x128xf32>
    %61 = vector.shape_cast %60 : vector<1x1x128xf32> to vector<1x128xf32>
    %62 = vector.broadcast %61 : vector<1x128xf32> to vector<8x128xf32>
    %63 = arith.addf %59, %62 : vector<8x128xf32>
    %c0_35 = arith.constant 0 : index
    %c0_36 = arith.constant 0 : index
    %c0_37 = arith.constant 0 : index
    %64 = vector.load %arg8[%c0_35, %c0_36, %c0_37] : memref<1x128x128xbf16, #tpu.memory_space<vmem>>, vector<1x128x128xbf16>
    %65 = vector.shape_cast %64 : vector<1x128x128xbf16> to vector<128x128xbf16>
    %cst_38 = arith.constant dense<0.000000e+00> : vector<8x128xf32>
    %66 = tpu.matmul %49, %65, %cst_38 {dimension_numbers = #tpu.dot_dimension_numbers<[1], [0], [0], [1], [0, 0, 1, 1], [], []>} : vector<8x128xbf16>, vector<128x128xbf16>, vector<8x128xf32> -> vector<8x128xf32>
    %c0_39 = arith.constant 0 : index
    %c0_40 = arith.constant 0 : index
    %c0_41 = arith.constant 0 : index
    %67 = vector.load %arg11[%c0_39, %c0_40, %c0_41] : memref<1x1x128xf32, #tpu.memory_space<vmem>>, vector<1x1x128xf32>
    %68 = vector.shape_cast %67 : vector<1x1x128xf32> to vector<1x128xf32>
    %69 = vector.broadcast %68 : vector<1x128xf32> to vector<8x128xf32>
    %70 = arith.addf %66, %69 : vector<8x128xf32>
    %cst_42 = arith.constant 0.176776692 : f32
    %71 = vector.broadcast %cst_42 : f32 to vector<1x128xf32>
    %72 = arith.mulf %56, %71 : vector<1x128xf32>
    %73 = vector.broadcast %72 : vector<1x128xf32> to vector<8x128xf32>
    %74 = arith.mulf %63, %73 : vector<8x128xf32>
    %c0_43 = arith.constant 0 : index
    %c0_44 = arith.constant 0 : index
    %75 = vector.load %arg14[%c0_43, %c0_44] : memref<128x4xf32, #tpu.memory_space<vmem>>, vector<128x4xf32>
    %cst_45 = arith.constant dense<0.000000e+00> : vector<8x4xf32>
    %76 = tpu.matmul %74, %75, %cst_45 {dimension_numbers = #tpu.dot_dimension_numbers<[1], [0], [0], [1], [0, 0, 1, 1], [], []>} : vector<8x128xf32>, vector<128x4xf32>, vector<8x4xf32> -> vector<8x4xf32>
    %cst_46 = arith.constant dense<0xFF800000> : vector<4xf32>
    %77 = vector.multi_reduction <maximumf>, %76, %cst_46 [0] : vector<8x4xf32> to vector<4xf32>
    %78 = vector.shape_cast %77 : vector<4xf32> to vector<1x4xf32>
    %79 = vector.broadcast %78 : vector<1x4xf32> to vector<8x4xf32>
    %80 = arith.subf %76, %79 : vector<8x4xf32>
    %81 = math.exp %80 : vector<8x4xf32>
    %cst_47 = arith.constant dense<0.000000e+00> : vector<4xf32>
    %82 = vector.multi_reduction <add>, %81, %cst_47 [0] : vector<8x4xf32> to vector<4xf32>
    %83 = vector.shape_cast %82 : vector<4xf32> to vector<1x4xf32>
    %84 = tpu.reciprocal %83 {approx = true} : vector<1x4xf32> -> vector<1x4xf32>
    %85 = vector.broadcast %84 : vector<1x4xf32> to vector<8x4xf32>
    %86 = arith.mulf %81, %85 : vector<8x4xf32>
    %c0_48 = arith.constant 0 : index
    %c0_49 = arith.constant 0 : index
    %87 = vector.load %arg15[%c0_48, %c0_49] : memref<4x128xf32, #tpu.memory_space<vmem>>, vector<4x128xf32>
    %cst_50 = arith.constant dense<0.000000e+00> : vector<8x128xf32>
    %88 = tpu.matmul %86, %87, %cst_50 {dimension_numbers = #tpu.dot_dimension_numbers<[1], [0], [0], [1], [0, 0, 1, 1], [], []>} : vector<8x4xf32>, vector<4x128xf32>, vector<8x128xf32> -> vector<8x128xf32>
    %89 = arith.mulf %70, %88 : vector<8x128xf32>
    %cst_51 = arith.constant dense<0.000000e+00> : vector<128xf32>
    %90 = vector.multi_reduction <add>, %89, %cst_51 [0] : vector<8x128xf32> to vector<128xf32>
    %91 = vector.shape_cast %90 : vector<128xf32> to vector<1x128xf32>
    %92 = arith.truncf %91 : vector<1x128xf32> to vector<1x128xbf16>
    %c0_52 = arith.constant 0 : index
    %c0_53 = arith.constant 0 : index
    %c0_54 = arith.constant 0 : index
    %93 = vector.load %arg12[%c0_52, %c0_53, %c0_54] : memref<1x128x128xbf16, #tpu.memory_space<vmem>>, vector<1x128x128xbf16>
    %94 = vector.shape_cast %93 : vector<1x128x128xbf16> to vector<128x128xbf16>
    %cst_55 = arith.constant dense<0.000000e+00> : vector<1x128xf32>
    %95 = tpu.matmul %92, %94, %cst_55 {dimension_numbers = #tpu.dot_dimension_numbers<[1], [0], [0], [1], [0, 0, 1, 1], [], []>} : vector<1x128xbf16>, vector<128x128xbf16>, vector<1x128xf32> -> vector<1x128xf32>
    %c0_56 = arith.constant 0 : index
    %c0_57 = arith.constant 0 : index
    %c0_58 = arith.constant 0 : index
    %96 = vector.load %arg13[%c0_56, %c0_57, %c0_58] : memref<1x1x128xf32, #tpu.memory_space<vmem>>, vector<1x1x128xf32>
    %97 = vector.shape_cast %96 : vector<1x1x128xf32> to vector<1x128xf32>
    %98 = arith.addf %95, %97 : vector<1x128xf32>
    %99 = arith.addf %6, %98 : vector<1x128xf32>
    %c0_59 = arith.constant 0 : index
    %c0_60 = arith.constant 0 : index
    %c0_61 = arith.constant 0 : index
    %100 = vector.load %arg16[%c0_59, %c0_60, %c0_61] : memref<1x1x128xf32, #tpu.memory_space<vmem>>, vector<1x1x128xf32>
    %101 = vector.shape_cast %100 : vector<1x1x128xf32> to vector<1x128xf32>
    %c0_62 = arith.constant 0 : index
    %c0_63 = arith.constant 0 : index
    %c0_64 = arith.constant 0 : index
    %102 = vector.load %arg17[%c0_62, %c0_63, %c0_64] : memref<1x1x128xf32, #tpu.memory_space<vmem>>, vector<1x1x128xf32>
    %103 = vector.shape_cast %102 : vector<1x1x128xf32> to vector<1x128xf32>
    %cst_65 = arith.constant dense<0.000000e+00> : vector<8xf32>
    %104 = vector.multi_reduction <add>, %4, %cst_65 [1] : vector<8x128xf32> to vector<8xf32>
    %105 = vector.shape_cast %104 : vector<8xf32> to vector<8x1xf32>
    %cst_66 = arith.constant 1.280000e+02 : f32
    %106 = vector.broadcast %cst_66 : f32 to vector<8x1xf32>
    %107 = arith.divf %105, %106 : vector<8x1xf32>
    %108 = vector.broadcast %107 : vector<8x1xf32> to vector<8x128xf32>
    %109 = arith.subf %4, %108 : vector<8x128xf32>
    %110 = arith.mulf %109, %109 : vector<8x128xf32>
    %cst_67 = arith.constant dense<0.000000e+00> : vector<8xf32>
    %111 = vector.multi_reduction <add>, %110, %cst_67 [1] : vector<8x128xf32> to vector<8xf32>
    %112 = vector.shape_cast %111 : vector<8xf32> to vector<8x1xf32>
    %cst_68 = arith.constant 1.280000e+02 : f32
    %113 = vector.broadcast %cst_68 : f32 to vector<8x1xf32>
    %114 = arith.divf %112, %113 : vector<8x1xf32>
    %cst_69 = arith.constant 9.99999997E-7 : f32
    %115 = vector.broadcast %cst_69 : f32 to vector<8x1xf32>
    %116 = arith.addf %114, %115 : vector<8x1xf32>
    %117 = math.rsqrt %116 : vector<8x1xf32>
    %118 = vector.broadcast %117 : vector<8x1xf32> to vector<8x128xf32>
    %119 = arith.mulf %109, %118 : vector<8x128xf32>
    %120 = vector.broadcast %101 : vector<1x128xf32> to vector<8x128xf32>
    %121 = arith.mulf %119, %120 : vector<8x128xf32>
    %122 = vector.broadcast %103 : vector<1x128xf32> to vector<8x128xf32>
    %123 = arith.addf %121, %122 : vector<8x128xf32>
    %124 = arith.truncf %123 : vector<8x128xf32> to vector<8x128xbf16>
    %c0_70 = arith.constant 0 : index
    %c0_71 = arith.constant 0 : index
    %c0_72 = arith.constant 0 : index
    %125 = vector.load %arg18[%c0_70, %c0_71, %c0_72] : memref<1x128x512xbf16, #tpu.memory_space<vmem>>, vector<1x128x512xbf16>
    %126 = vector.shape_cast %125 : vector<1x128x512xbf16> to vector<128x512xbf16>
    %cst_73 = arith.constant dense<0.000000e+00> : vector<8x512xf32>
    %127 = tpu.matmul %124, %126, %cst_73 {dimension_numbers = #tpu.dot_dimension_numbers<[1], [0], [0], [1], [0, 0, 1, 1], [], []>} : vector<8x128xbf16>, vector<128x512xbf16>, vector<8x512xf32> -> vector<8x512xf32>
    %c0_74 = arith.constant 0 : index
    %c0_75 = arith.constant 0 : index
    %c0_76 = arith.constant 0 : index
    %128 = vector.load %arg19[%c0_74, %c0_75, %c0_76] : memref<1x1x512xf32, #tpu.memory_space<vmem>>, vector<1x1x512xf32>
    %129 = vector.shape_cast %128 : vector<1x1x512xf32> to vector<1x512xf32>
    %130 = vector.broadcast %129 : vector<1x512xf32> to vector<8x512xf32>
    %131 = arith.addf %127, %130 : vector<8x512xf32>
    %cst_77 = arith.constant 5.000000e-01 : f32
    %132 = vector.broadcast %cst_77 : f32 to vector<8x512xf32>
    %133 = arith.mulf %132, %131 : vector<8x512xf32>
    %cst_78 = arith.constant 4.471500e-02 : f32
    %134 = vector.broadcast %cst_78 : f32 to vector<8x512xf32>
    %135 = arith.mulf %134, %131 : vector<8x512xf32>
    %136 = arith.mulf %135, %131 : vector<8x512xf32>
    %137 = arith.mulf %136, %131 : vector<8x512xf32>
    %138 = arith.addf %131, %137 : vector<8x512xf32>
    %cst_79 = arith.constant 0.797884583 : f32
    %139 = vector.broadcast %cst_79 : f32 to vector<8x512xf32>
    %140 = arith.mulf %139, %138 : vector<8x512xf32>
    %141 = math.tanh %140 : vector<8x512xf32>
    %cst_80 = arith.constant 1.000000e+00 : f32
    %142 = vector.broadcast %cst_80 : f32 to vector<8x512xf32>
    %143 = arith.addf %142, %141 : vector<8x512xf32>
    %144 = arith.mulf %133, %143 : vector<8x512xf32>
    %145 = arith.truncf %144 : vector<8x512xf32> to vector<8x512xbf16>
    %c0_81 = arith.constant 0 : index
    %c0_82 = arith.constant 0 : index
    %c0_83 = arith.constant 0 : index
    %146 = vector.load %arg20[%c0_81, %c0_82, %c0_83] : memref<1x512x128xbf16, #tpu.memory_space<vmem>>, vector<1x512x128xbf16>
    %147 = vector.shape_cast %146 : vector<1x512x128xbf16> to vector<512x128xbf16>
    %cst_84 = arith.constant dense<0.000000e+00> : vector<8x128xf32>
    %148 = tpu.matmul %145, %147, %cst_84 {dimension_numbers = #tpu.dot_dimension_numbers<[1], [0], [0], [1], [0, 0, 1, 1], [], []>} : vector<8x512xbf16>, vector<512x128xbf16>, vector<8x128xf32> -> vector<8x128xf32>
    %c0_85 = arith.constant 0 : index
    %c0_86 = arith.constant 0 : index
    %c0_87 = arith.constant 0 : index
    %149 = vector.load %arg21[%c0_85, %c0_86, %c0_87] : memref<1x1x128xf32, #tpu.memory_space<vmem>>, vector<1x1x128xf32>
    %150 = vector.shape_cast %149 : vector<1x1x128xf32> to vector<1x128xf32>
    %151 = vector.broadcast %150 : vector<1x128xf32> to vector<8x128xf32>
    %152 = arith.addf %148, %151 : vector<8x128xf32>
    %153 = arith.addf %4, %152 : vector<8x128xf32>
    %c0_88 = arith.constant 0 : index
    %c0_89 = arith.constant 0 : index
    %c0_90 = arith.constant 0 : index
    %154 = vector.load %arg24[%c0_88, %c0_89, %c0_90] : memref<1x8x128xf32, #tpu.memory_space<vmem>>, vector<1x8x128xf32>
    %155 = vector.shape_cast %154 : vector<1x8x128xf32> to vector<8x128xf32>
    %156 = vector.shape_cast %153 : vector<8x128xf32> to vector<1x8x128xf32>
    tpu.vector_store %arg24[%c0_88, %c0_89, %c0_90], %156 {strides = array<i32>} : memref<1x8x128xf32, #tpu.memory_space<vmem>>, vector<1x8x128xf32>,
    %c0_91 = arith.constant 0 : index
    %c0_92 = arith.constant 0 : index
    %157 = vector.load %arg22[%c0_91, %c0_92] : memref<1x128xf32, #tpu.memory_space<vmem>>, vector<1x128xf32>
    %c0_93 = arith.constant 0 : index
    %c0_94 = arith.constant 0 : index
    %158 = vector.load %arg23[%c0_93, %c0_94] : memref<1x128xf32, #tpu.memory_space<vmem>>, vector<1x128xf32>
    %cst_95 = arith.constant dense<0.000000e+00> : vector<1xf32>
    %159 = vector.multi_reduction <add>, %99, %cst_95 [1] : vector<1x128xf32> to vector<1xf32>
    %160 = vector.shape_cast %159 : vector<1xf32> to vector<1x1xf32>
    %cst_96 = arith.constant 1.280000e+02 : f32
    %161 = vector.broadcast %cst_96 : f32 to vector<1x1xf32>
    %162 = arith.divf %160, %161 : vector<1x1xf32>
    %163 = vector.broadcast %162 : vector<1x1xf32> to vector<1x128xf32>
    %164 = arith.subf %99, %163 : vector<1x128xf32>
    %165 = arith.mulf %164, %164 : vector<1x128xf32>
    %cst_97 = arith.constant dense<0.000000e+00> : vector<1xf32>
    %166 = vector.multi_reduction <add>, %165, %cst_97 [1] : vector<1x128xf32> to vector<1xf32>
    %167 = vector.shape_cast %166 : vector<1xf32> to vector<1x1xf32>
    %cst_98 = arith.constant 1.280000e+02 : f32
    %168 = vector.broadcast %cst_98 : f32 to vector<1x1xf32>
    %169 = arith.divf %167, %168 : vector<1x1xf32>
    %cst_99 = arith.constant 9.99999997E-7 : f32
    %170 = vector.broadcast %cst_99 : f32 to vector<1x1xf32>
    %171 = arith.addf %169, %170 : vector<1x1xf32>
    %172 = math.rsqrt %171 : vector<1x1xf32>
    %173 = vector.broadcast %172 : vector<1x1xf32> to vector<1x128xf32>
    %174 = arith.mulf %164, %173 : vector<1x128xf32>
    %175 = arith.mulf %174, %157 : vector<1x128xf32>
    %176 = arith.addf %175, %158 : vector<1x128xf32>
    %c2_i32 = arith.constant 2 : i32
    %177 = arith.cmpi eq, %arg1, %c2_i32 : i32
    %178 = arith.select %177, %176, %99 : vector<1x128xf32>
    %c0_100 = arith.constant 0 : index
    %c0_101 = arith.constant 0 : index
    %c0_102 = arith.constant 0 : index
    %179 = vector.load %arg25[%c0_100, %c0_101, %c0_102] : memref<1x1x128xf32, #tpu.memory_space<vmem>>, vector<1x1x128xf32>
    %180 = vector.shape_cast %179 : vector<1x1x128xf32> to vector<1x128xf32>
    %181 = vector.shape_cast %178 : vector<1x128xf32> to vector<1x1x128xf32>
    tpu.vector_store %arg25[%c0_100, %c0_101, %c0_102], %181 {strides = array<i32>} : memref<1x1x128xf32, #tpu.memory_space<vmem>>, vector<1x1x128xf32>,
    return
  }
  func.func @transform_0(%arg0: i32, %arg1: i32) -> (i32, i32, i32) {
    %c0_i32 = arith.constant 0 : i32
    %c0_i32_0 = arith.constant 0 : i32
    %c0_i32_1 = arith.constant 0 : i32
    return %arg0, %c0_i32, %c0_i32_0 : i32, i32, i32
  }
  func.func @transform_1(%arg0: i32, %arg1: i32) -> (i32, i32, i32) {
    %c0_i32 = arith.constant 0 : i32
    %c0_i32_0 = arith.constant 0 : i32
    %c0_i32_1 = arith.constant 0 : i32
    return %arg0, %c0_i32, %c0_i32_0 : i32, i32, i32
  }
  func.func @transform_2(%arg0: i32, %arg1: i32) -> (i32, i32, i32) {
    %c0_i32 = arith.constant 0 : i32
    %c0_i32_0 = arith.constant 0 : i32
    %c0_i32_1 = arith.constant 0 : i32
    return %arg1, %c0_i32, %c0_i32_0 : i32, i32, i32
  }
  func.func @transform_3(%arg0: i32, %arg1: i32) -> (i32, i32, i32) {
    %c0_i32 = arith.constant 0 : i32
    %c0_i32_0 = arith.constant 0 : i32
    %c0_i32_1 = arith.constant 0 : i32
    return %arg1, %c0_i32, %c0_i32_0 : i32, i32, i32
  }
  func.func @transform_4(%arg0: i32, %arg1: i32) -> (i32, i32, i32) {
    %c0_i32 = arith.constant 0 : i32
    %c0_i32_0 = arith.constant 0 : i32
    %c0_i32_1 = arith.constant 0 : i32
    return %arg1, %c0_i32, %c0_i32_0 : i32, i32, i32
  }
  func.func @transform_5(%arg0: i32, %arg1: i32) -> (i32, i32, i32) {
    %c0_i32 = arith.constant 0 : i32
    %c0_i32_0 = arith.constant 0 : i32
    %c0_i32_1 = arith.constant 0 : i32
    return %arg1, %c0_i32, %c0_i32_0 : i32, i32, i32
  }
  func.func @transform_6(%arg0: i32, %arg1: i32) -> (i32, i32, i32) {
    %c0_i32 = arith.constant 0 : i32
    %c0_i32_0 = arith.constant 0 : i32
    %c0_i32_1 = arith.constant 0 : i32
    return %arg1, %c0_i32, %c0_i32_0 : i32, i32, i32
  }
  func.func @transform_7(%arg0: i32, %arg1: i32) -> (i32, i32, i32) {
    %c0_i32 = arith.constant 0 : i32
    %c0_i32_0 = arith.constant 0 : i32
    %c0_i32_1 = arith.constant 0 : i32
    return %arg1, %c0_i32, %c0_i32_0 : i32, i32, i32
  }
  func.func @transform_8(%arg0: i32, %arg1: i32) -> (i32, i32, i32) {
    %c0_i32 = arith.constant 0 : i32
    %c0_i32_0 = arith.constant 0 : i32
    %c0_i32_1 = arith.constant 0 : i32
    return %arg1, %c0_i32, %c0_i32_0 : i32, i32, i32
  }
  func.func @transform_9(%arg0: i32, %arg1: i32) -> (i32, i32, i32) {
    %c0_i32 = arith.constant 0 : i32
    %c0_i32_0 = arith.constant 0 : i32
    %c0_i32_1 = arith.constant 0 : i32
    return %arg1, %c0_i32, %c0_i32_0 : i32, i32, i32
  }
  func.func @transform_10(%arg0: i32, %arg1: i32) -> (i32, i32, i32) {
    %c0_i32 = arith.constant 0 : i32
    %c0_i32_0 = arith.constant 0 : i32
    %c0_i32_1 = arith.constant 0 : i32
    return %arg1, %c0_i32, %c0_i32_0 : i32, i32, i32
  }
  func.func @transform_11(%arg0: i32, %arg1: i32) -> (i32, i32, i32) {
    %c0_i32 = arith.constant 0 : i32
    %c0_i32_0 = arith.constant 0 : i32
    %c0_i32_1 = arith.constant 0 : i32
    return %arg1, %c0_i32, %c0_i32_0 : i32, i32, i32
  }
  func.func @transform_12(%arg0: i32, %arg1: i32) -> (i32, i32) {
    %c0_i32 = arith.constant 0 : i32
    %c0_i32_0 = arith.constant 0 : i32
    %c0_i32_1 = arith.constant 0 : i32
    return %c0_i32, %c0_i32_0 : i32, i32
  }
  func.func @transform_13(%arg0: i32, %arg1: i32) -> (i32, i32) {
    %c0_i32 = arith.constant 0 : i32
    %c0_i32_0 = arith.constant 0 : i32
    %c0_i32_1 = arith.constant 0 : i32
    return %c0_i32, %c0_i32_0 : i32, i32
  }
  func.func @transform_14(%arg0: i32, %arg1: i32) -> (i32, i32, i32) {
    %c0_i32 = arith.constant 0 : i32
    %c0_i32_0 = arith.constant 0 : i32
    %c0_i32_1 = arith.constant 0 : i32
    return %arg1, %c0_i32, %c0_i32_0 : i32, i32, i32
  }
  func.func @transform_15(%arg0: i32, %arg1: i32) -> (i32, i32, i32) {
    %c0_i32 = arith.constant 0 : i32
    %c0_i32_0 = arith.constant 0 : i32
    %c0_i32_1 = arith.constant 0 : i32
    return %arg1, %c0_i32, %c0_i32_0 : i32, i32, i32
  }
  func.func @transform_16(%arg0: i32, %arg1: i32) -> (i32, i32, i32) {
    %c0_i32 = arith.constant 0 : i32
    %c0_i32_0 = arith.constant 0 : i32
    %c0_i32_1 = arith.constant 0 : i32
    return %arg1, %c0_i32, %c0_i32_0 : i32, i32, i32
  }
  func.func @transform_17(%arg0: i32, %arg1: i32) -> (i32, i32, i32) {
    %c0_i32 = arith.constant 0 : i32
    %c0_i32_0 = arith.constant 0 : i32
    %c0_i32_1 = arith.constant 0 : i32
    return %arg1, %c0_i32, %c0_i32_0 : i32, i32, i32
  }
  func.func @transform_18(%arg0: i32, %arg1: i32) -> (i32, i32, i32) {
    %c0_i32 = arith.constant 0 : i32
    %c0_i32_0 = arith.constant 0 : i32
    %c0_i32_1 = arith.constant 0 : i32
    return %arg1, %c0_i32, %c0_i32_0 : i32, i32, i32
  }
  func.func @transform_19(%arg0: i32, %arg1: i32) -> (i32, i32, i32) {
    %c0_i32 = arith.constant 0 : i32
    %c0_i32_0 = arith.constant 0 : i32
    %c0_i32_1 = arith.constant 0 : i32
    return %arg1, %c0_i32, %c0_i32_0 : i32, i32, i32
  }
  func.func @transform_20(%arg0: i32, %arg1: i32) -> (i32, i32) {
    %c0_i32 = arith.constant 0 : i32
    %c0_i32_0 = arith.constant 0 : i32
    %c0_i32_1 = arith.constant 0 : i32
    return %c0_i32, %c0_i32_0 : i32, i32
  }
  func.func @transform_21(%arg0: i32, %arg1: i32) -> (i32, i32) {
    %c0_i32 = arith.constant 0 : i32
    %c0_i32_0 = arith.constant 0 : i32
    %c0_i32_1 = arith.constant 0 : i32
    return %c0_i32, %c0_i32_0 : i32, i32
  }
  func.func @transform_22(%arg0: i32, %arg1: i32) -> (i32, i32, i32) {
    %c0_i32 = arith.constant 0 : i32
    %c0_i32_0 = arith.constant 0 : i32
    %c0_i32_1 = arith.constant 0 : i32
    return %arg0, %c0_i32, %c0_i32_0 : i32, i32, i32
  }
  func.func @transform_23(%arg0: i32, %arg1: i32) -> (i32, i32, i32) {
    %c0_i32 = arith.constant 0 : i32
    %c0_i32_0 = arith.constant 0 : i32
    %c0_i32_1 = arith.constant 0 : i32
    return %arg0, %c0_i32, %c0_i32_0 : i32, i32, i32
  }
}

</mosaic_0001>

<llo_original>
// kernel: tpu_custom_call.1
$region0: #{tpu_custom_call.1}
  #allocation0 [shape = 'u32[]', space=smem, size = 0x4, offset = 0x4, fixed_abs, tag = 'smem constant byte address 0x4 - core index']
  #allocation1 [shape = 'u32[144,128]{1,0:T(1,128)}', space=vmem, size = 0x12000, scoped, tag = 'internal scratch']
  %s0 = inlined_call_operand.vmem [shape: f32[2,8,128], index: 0, kind: input, shape index: {}]
  %s1 = inlined_call_operand.vmem [shape: f32[2,1,128], index: 1, kind: input, shape index: {}]
  %s2 = inlined_call_operand.vmem [shape: f32[3,1,128], index: 2, kind: input, shape index: {}]
  %s3 = inlined_call_operand.vmem [shape: f32[3,1,128], index: 3, kind: input, shape index: {}]
  %s4 = inlined_call_operand.hbm [shape: bf16[3,128,128], index: 4, kind: input, shape index: {}]
  %s5 = inlined_call_operand.hbm [shape: bf16[3,128,128], index: 5, kind: input, shape index: {}]
  %s6 = inlined_call_operand.hbm [shape: bf16[3,128,128], index: 6, kind: input, shape index: {}]
  %s7 = inlined_call_operand.vmem [shape: f32[3,1,128], index: 7, kind: input, shape index: {}]
  %s8 = inlined_call_operand.vmem [shape: f32[3,1,128], index: 8, kind: input, shape index: {}]
  %s9 = inlined_call_operand.vmem [shape: f32[3,1,128], index: 9, kind: input, shape index: {}]
  %s10 = inlined_call_operand.hbm [shape: bf16[3,128,128], index: 10, kind: input, shape index: {}]
  %s11 = inlined_call_operand.vmem [shape: f32[3,1,128], index: 11, kind: input, shape index: {}]
  %s12 = inlined_call_operand.vmem [shape: f32[128,4], index: 12, kind: input, shape index: {}]
  %s13 = inlined_call_operand.vmem [shape: f32[4,128], index: 13, kind: input, shape index: {}]
  %s14 = inlined_call_operand.vmem [shape: f32[3,1,128], index: 14, kind: input, shape index: {}]
  %s15 = inlined_call_operand.vmem [shape: f32[3,1,128], index: 15, kind: input, shape index: {}]
  %s16 = inlined_call_operand.hbm [shape: bf16[3,128,512], index: 16, kind: input, shape index: {}]
  %s17 = inlined_call_operand.vmem [shape: f32[3,1,512], index: 17, kind: input, shape index: {}]
  %s18 = inlined_call_operand.hbm [shape: bf16[3,512,128], index: 18, kind: input, shape index: {}]
  %s19 = inlined_call_operand.vmem [shape: f32[3,1,128], index: 19, kind: input, shape index: {}]
  %s20 = inlined_call_operand.vmem [shape: f32[1,128], index: 20, kind: input, shape index: {}]
  %s21 = inlined_call_operand.vmem [shape: f32[1,128], index: 21, kind: input, shape index: {}]
  %s22 = inlined_call_operand.hbm [shape: f32[2,8,128], index: 22, kind: output, shape index: {0}]
  %s23 = inlined_call_operand.hbm [shape: f32[2,1,128], index: 23, kind: output, shape index: {1}]
  %24 = xla_tuple %s22, %s23
  %s25 = sld [smem:[#allocation0]]
  $region157: #{tpu_custom_call.1} parent=0
    _
  %s27 = ssub.s32 1, %s25
  %s28 = scalar_select 0, %s27, %s25
  $region1: #{tpu_custom_call.1} parent=0
    #allocation2 [shape = 'u8[65536]{0}', space=vmem, size = 0x10000, scoped, tag = 'input window, operand 4']
    #allocation3 [shape = 's32[2]{0}', space=sflag, size = 0x8, scoped, tag = 'scoped memory for tpu_custom_call.1']
    #allocation4 [shape = 's32[2]{0}', space=sflag, size = 0x8, scoped, tag = 'scoped memory for tpu_custom_call.1']
    #allocation5 [shape = 'u8[65536]{0}', space=vmem, size = 0x10000, scoped, tag = 'input window, operand 5']
    #allocation6 [shape = 's32[2]{0}', space=sflag, size = 0x8, scoped, tag = 'scoped memory for tpu_custom_call.1']
    #allocation7 [shape = 'u8[65536]{0}', space=vmem, size = 0x10000, scoped, tag = 'input window, operand 6']
    #allocation8 [shape = 'u8[65536]{0}', space=vmem, size = 0x10000, scoped, tag = 'input window, operand 10']
    #allocation9 [shape = 's32[2]{0}', space=sflag, size = 0x8, scoped, tag = 'scoped memory for tpu_custom_call.1']
    #allocation10 [shape = 'u8[262144]{0}', space=vmem, size = 0x40000, scoped, tag = 'input window, operand 16']
    #allocation11 [shape = 'u8[262144]{0}', space=vmem, size = 0x40000, scoped, tag = 'input window, operand 18']
    #allocation12 [shape = 's32[2]{0}', space=sflag, size = 0x8, scoped, tag = 'scoped memory for tpu_custom_call.1']
    #allocation13 [shape = 'u8[8192]{0}', space=vmem, size = 0x2000, scoped, tag = 'output window, operand 0']
    #allocation14 [shape = 'u8[1024]{0}', space=vmem, size = 0x400, scoped, tag = 'output window, operand 1']
    #allocation15 [shape = 's32[2]{0}', space=sflag, size = 0x8, scoped, tag = 'scoped memory for tpu_custom_call.1']
    %29 = vsyncpa [#allocation3], 0
    %s30 = scalar_lea.sflag [#allocation3], 1
    %31 = vsyncpa %s30, 0
    %32 = vsyncpa [#allocation6], 0
    %s33 = scalar_lea.sflag [#allocation6], 1
    %34 = vsyncpa %s33, 0
    %35 = vsyncpa [#allocation9], 0
    %s36 = scalar_lea.sflag [#allocation9], 1
    %37 = vsyncpa %s36, 0
    %38 = vsyncpa [#allocation12], 0
    %s39 = scalar_lea.sflag [#allocation12], 1
    %40 = vsyncpa %s39, 0
    %41 = vsyncpa [#allocation4], 0
    %s42 = scalar_lea.sflag [#allocation4], 1
    %43 = vsyncpa %s42, 0
    %44 = vsyncpa [#allocation15], 0
    %s45 = scalar_lea.sflag [#allocation15], 1
    %46 = vsyncpa %s45, 0
    loop: start=0, step=1, limit=8
    $region2: #{tpu_custom_call.1} parent=1 // loop_pre_header
      _
    $region3: #{tpu_custom_call.1} parent=1 // loop_header
      %s48 = sphi 0, %s52
      %p49 = scmp.ge.s32.totalorder %s48, 8
      %s55 = sphi 0, %s67
      %s56 = sphi 0, %s63
      %s57 = sphi 0, %s55
      %s58 = sphi 0, %s56
      %s59 = sphi 0, %s57
      %s60 = sphi 0, %s58
      %s70 = sphi 0, %s72
      %s73 = sphi 0, %s70
      %s74 = sphi 0, %s73
      %s90 = sphi 0, %s74
      %s96 = sphi 0, %s98
      %s99 = sphi 0, %s96
      %s100 = sphi 0, %s99
      %s116 = sphi 0, %s100
      %s122 = sphi 0, %s124
      %s125 = sphi 0, %s122
      %s126 = sphi 0, %s125
      %s142 = sphi 0, %s126
      %s148 = sphi 0, %s150
      %s151 = sphi 0, %s148
      %s152 = sphi 0, %s151
      %s168 = sphi 0, %s152
      %s174 = sphi 0, %s176
      %s177 = sphi 0, %s174
      %s178 = sphi 0, %s177
      %s194 = sphi 0, %s178
      %s200 = sphi 0, %s202
      %s203 = sphi 0, %s200
      %s204 = sphi 0, %s203
      %s220 = sphi 0, %s204
      %s226 = sphi 0, %s228
      %s229 = sphi 0, %s226
      %s230 = sphi 0, %s229
      %s246 = sphi 0, %s230
      %s252 = sphi 0, %s254
      %s255 = sphi 0, %s252
      %s256 = sphi 0, %s255
      %s272 = sphi 0, %s256
      %s278 = sphi 0, %s280
      %s281 = sphi 0, %s278
      %s282 = sphi 0, %s281
      %s298 = sphi 0, %s282
      %s304 = sphi 0, %s306
      %s307 = sphi 0, %s304
      %s308 = sphi 0, %s307
      %s324 = sphi 0, %s308
      %s330 = sphi 0, %s332
      %s333 = sphi 0, %s330
      %s334 = sphi 0, %s333
      %s350 = sphi 0, %s334
      %s356 = sphi 0, %s358
      %s359 = sphi 0, %s356
      %s360 = sphi 0, %s359
      %s376 = sphi 0, %s360
      %s380 = sphi 0, %s380
      %s382 = sphi 0, %s380
      %s383 = sphi 0, %s382
      %s397 = sphi 0, %s383
      %s401 = sphi 0, %s401
      %s403 = sphi 0, %s401
      %s404 = sphi 0, %s403
      %s418 = sphi 0, %s404
      %s424 = sphi 0, %s426
      %s427 = sphi 0, %s424
      %s428 = sphi 0, %s427
      %s444 = sphi 0, %s428
      %s450 = sphi 0, %s452
      %s453 = sphi 0, %s450
      %s454 = sphi 0, %s453
      %s470 = sphi 0, %s454
      %s476 = sphi 0, %s478
      %s479 = sphi 0, %s476
      %s480 = sphi 0, %s479
      %s496 = sphi 0, %s480
      %s502 = sphi 0, %s504
      %s505 = sphi 0, %s502
      %s506 = sphi 0, %s505
      %s522 = sphi 0, %s506
      %s528 = sphi 0, %s530
      %s531 = sphi 0, %s528
      %s532 = sphi 0, %s531
      %s548 = sphi 0, %s532
      %s554 = sphi 0, %s556
      %s557 = sphi 0, %s554
      %s558 = sphi 0, %s557
      %s574 = sphi 0, %s558
      %s578 = sphi 0, %s578
      %s580 = sphi 0, %s578
      %s581 = sphi 0, %s580
      %s595 = sphi 0, %s581
      %s599 = sphi 0, %s599
      %s601 = sphi 0, %s599
      %s602 = sphi 0, %s601
      %s616 = sphi 0, %s602
      %s622 = sphi 0, %s624
      %s625 = sphi 0, %s622
      %s626 = sphi 0, %s625
      %s642 = sphi 0, %s626
      %s648 = sphi 0, %s650
      %s651 = sphi 0, %s648
      %s652 = sphi 0, %s651
      %s668 = sphi 0, %s652
    $region4: #{tpu_custom_call.1} parent=1 // loop_header_branch
      %51 = sbr.rel (%p49) target = $region8
    $region5: #{tpu_custom_call.1} parent=1 // loop_body
      %s53 = ssub.s32 %s48, 1
      %s54 = ssub.s32 %s48, 2
      %s61 = sadd.s32 1, %s56
      %p62 = scmp.ge.s32.totalorder %s61, 3
      %s63 = scalar_select %p62, 0, %s61
      %s64 = sadd.s32 1, %s55
      %s65 = scalar_select %p62, %s64, %s55
      %p66 = scmp.ge.s32.totalorder %s65, 2
      %s67 = scalar_select %p66, 0, %s65
      %s68 = ssub.s32 %s55, %s67
      %p69 = scmp.eq.s32.totalorder %s68, 0
      %s71 = sadd.s32 %s70, 1
      %s72 = scalar_select %p69, %s70, %s71
      %p75 = pneg %p69
      %p76 = scmp.eq.s32.totalorder %s48, 5
      %p77 = por %p75, %p76
      %p78 = scmp.ne.s32.totalorder %s70, %s73
      %p79 = scmp.eq.s32.totalorder %s48, 0
      %p80 = por %p78, %p79
      %p81 = scmp.ne.s32.totalorder %s70, %s73
      %p82 = scmp.eq.s32.totalorder %s53, 5
      %p83 = por %p81, %p82
      %p84 = scmp.ne.s32.totalorder %s73, %s74
      %p85 = scmp.eq.s32.totalorder %s53, 0
      %p86 = por %p84, %p85
      %p87 = scmp.ne.s32.totalorder %s73, %s74
      %p88 = scmp.eq.s32.totalorder %s54, 5
      %p89 = por %p87, %p88
      %p91 = scmp.ne.s32.totalorder %s74, %s90
      %p92 = scmp.eq.s32.totalorder %s54, 0
      %p93 = por %p91, %p92
      %s94 = ssub.s32 %s55, %s67
      %p95 = scmp.eq.s32.totalorder %s94, 0
      %s97 = sadd.s32 %s96, 1
      %s98 = scalar_select %p95, %s96, %s97
      %p101 = pneg %p95
      %p102 = scmp.eq.s32.totalorder %s48, 5
      %p103 = por %p101, %p102
      %p104 = scmp.ne.s32.totalorder %s96, %s99
      %p105 = scmp.eq.s32.totalorder %s48, 0
      %p106 = por %p104, %p105
      %p107 = scmp.ne.s32.totalorder %s96, %s99
      %p108 = scmp.eq.s32.totalorder %s53, 5
      %p109 = por %p107, %p108
      %p110 = scmp.ne.s32.totalorder %s99, %s100
      %p111 = scmp.eq.s32.totalorder %s53, 0
      %p112 = por %p110, %p111
      %p113 = scmp.ne.s32.totalorder %s99, %s100
      %p114 = scmp.eq.s32.totalorder %s54, 5
      %p115 = por %p113, %p114
      %p117 = scmp.ne.s32.totalorder %s100, %s116
      %p118 = scmp.eq.s32.totalorder %s54, 0
      %p119 = por %p117, %p118
      %s120 = ssub.s32 %s56, %s63
      %p121 = scmp.eq.s32.totalorder %s120, 0
      %s123 = sadd.s32 %s122, 1
      %s124 = scalar_select %p121, %s122, %s123
      %p127 = pneg %p121
      %p128 = scmp.eq.s32.totalorder %s48, 5
      %p129 = por %p127, %p128
      %p130 = scmp.ne.s32.totalorder %s122, %s125
      %p131 = scmp.eq.s32.totalorder %s48, 0
      %p132 = por %p130, %p131
      %p133 = scmp.ne.s32.totalorder %s122, %s125
      %p134 = scmp.eq.s32.totalorder %s53, 5
      %p135 = por %p133, %p134
      %p136 = scmp.ne.s32.totalorder %s125, %s126
      %p137 = scmp.eq.s32.totalorder %s53, 0
      %p138 = por %p136, %p137
      %p139 = scmp.ne.s32.totalorder %s125, %s126
      %p140 = scmp.eq.s32.totalorder %s54, 5
      %p141 = por %p139, %p140
      %p143 = scmp.ne.s32.totalorder %s126, %s142
      %p144 = scmp.eq.s32.totalorder %s54, 0
      %p145 = por %p143, %p144
      %s146 = ssub.s32 %s56, %s63
      %p147 = scmp.eq.s32.totalorder %s146, 0
      %s149 = sadd.s32 %s148, 1
      %s150 = scalar_select %p147, %s148, %s149
      %p153 = pneg %p147
      %p154 = scmp.eq.s32.totalorder %s48, 5
      %p155 = por %p153, %p154
      %p156 = scmp.ne.s32.totalorder %s148, %s151
      %p157 = scmp.eq.s32.totalorder %s48, 0
      %p158 = por %p156, %p157
      %p159 = scmp.ne.s32.totalorder %s148, %s151
      %p160 = scmp.eq.s32.totalorder %s53, 5
      %p161 = por %p159, %p160
      %p162 = scmp.ne.s32.totalorder %s151, %s152
      %p163 = scmp.eq.s32.totalorder %s53, 0
      %p164 = por %p162, %p163
      %p165 = scmp.ne.s32.totalorder %s151, %s152
      %p166 = scmp.eq.s32.totalorder %s54, 5
      %p167 = por %p165, %p166
      %p169 = scmp.ne.s32.totalorder %s152, %s168
      %p170 = scmp.eq.s32.totalorder %s54, 0
      %p171 = por %p169, %p170
      %s172 = ssub.s32 %s56, %s63
      %p173 = scmp.eq.s32.totalorder %s172, 0
      %s175 = sadd.s32 %s174, 1
      %s176 = scalar_select %p173, %s174, %s175
      %p179 = pneg %p173
      %p180 = scmp.eq.s32.totalorder %s48, 5
      %p181 = por %p179, %p180
      %p182 = scmp.ne.s32.totalorder %s174, %s177
      %p183 = scmp.eq.s32.totalorder %s48, 0
      %p184 = por %p182, %p183
      %p185 = scmp.ne.s32.totalorder %s174, %s177
      %p186 = scmp.eq.s32.totalorder %s53, 5
      %p187 = por %p185, %p186
      %p188 = scmp.ne.s32.totalorder %s177, %s178
      %p189 = scmp.eq.s32.totalorder %s53, 0
      %p190 = por %p188, %p189
      %p191 = scmp.ne.s32.totalorder %s177, %s178
      %p192 = scmp.eq.s32.totalorder %s54, 5
      %p193 = por %p191, %p192
      %p195 = scmp.ne.s32.totalorder %s178, %s194
      %p196 = scmp.eq.s32.totalorder %s54, 0
      %p197 = por %p195, %p196
      %s198 = ssub.s32 %s56, %s63
      %p199 = scmp.eq.s32.totalorder %s198, 0
      %s201 = sadd.s32 %s200, 1
      %s202 = scalar_select %p199, %s200, %s201
      %p205 = pneg %p199
      %p206 = scmp.eq.s32.totalorder %s48, 5
      %p207 = por %p205, %p206
      %p208 = scmp.ne.s32.totalorder %s200, %s203
      %p209 = scmp.eq.s32.totalorder %s48, 0
      %p210 = por %p208, %p209
      %p211 = scmp.ne.s32.totalorder %s200, %s203
      %p212 = scmp.eq.s32.totalorder %s53, 5
      %p213 = por %p211, %p212
      %p214 = scmp.ne.s32.totalorder %s203, %s204
      %p215 = scmp.eq.s32.totalorder %s53, 0
      %p216 = por %p214, %p215
      %p217 = scmp.ne.s32.totalorder %s203, %s204
      %p218 = scmp.eq.s32.totalorder %s54, 5
      %p219 = por %p217, %p218
      %p221 = scmp.ne.s32.totalorder %s204, %s220
      %p222 = scmp.eq.s32.totalorder %s54, 0
      %p223 = por %p221, %p222
      %s224 = ssub.s32 %s56, %s63
      %p225 = scmp.eq.s32.totalorder %s224, 0
      %s227 = sadd.s32 %s226, 1
      %s228 = scalar_select %p225, %s226, %s227
      %p231 = pneg %p225
      %p232 = scmp.eq.s32.totalorder %s48, 5
      %p233 = por %p231, %p232
      %p234 = scmp.ne.s32.totalorder %s226, %s229
      %p235 = scmp.eq.s32.totalorder %s48, 0
      %p236 = por %p234, %p235
      %p237 = scmp.ne.s32.totalorder %s226, %s229
      %p238 = scmp.eq.s32.totalorder %s53, 5
      %p239 = por %p237, %p238
      %p240 = scmp.ne.s32.totalorder %s229, %s230
      %p241 = scmp.eq.s32.totalorder %s53, 0
      %p242 = por %p240, %p241
      %p243 = scmp.ne.s32.totalorder %s229, %s230
      %p244 = scmp.eq.s32.totalorder %s54, 5
      %p245 = por %p243, %p244
      %p247 = scmp.ne.s32.totalorder %s230, %s246
      %p248 = scmp.eq.s32.totalorder %s54, 0
      %p249 = por %p247, %p248
      %s250 = ssub.s32 %s56, %s63
      %p251 = scmp.eq.s32.totalorder %s250, 0
      %s253 = sadd.s32 %s252, 1
      %s254 = scalar_select %p251, %s252, %s253
      %p257 = pneg %p251
      %p258 = scmp.eq.s32.totalorder %s48, 5
      %p259 = por %p257, %p258
      %p260 = scmp.ne.s32.totalorder %s252, %s255
      %p261 = scmp.eq.s32.totalorder %s48, 0
      %p262 = por %p260, %p261
      %p263 = scmp.ne.s32.totalorder %s252, %s255
      %p264 = scmp.eq.s32.totalorder %s53, 5
      %p265 = por %p263, %p264
      %p266 = scmp.ne.s32.totalorder %s255, %s256
      %p267 = scmp.eq.s32.totalorder %s53, 0
      %p268 = por %p266, %p267
      %p269 = scmp.ne.s32.totalorder %s255, %s256
      %p270 = scmp.eq.s32.totalorder %s54, 5
      %p271 = por %p269, %p270
      %p273 = scmp.ne.s32.totalorder %s256, %s272
      %p274 = scmp.eq.s32.totalorder %s54, 0
      %p275 = por %p273, %p274
      %s276 = ssub.s32 %s56, %s63
      %p277 = scmp.eq.s32.totalorder %s276, 0
      %s279 = sadd.s32 %s278, 1
      %s280 = scalar_select %p277, %s278, %s279
      %p283 = pneg %p277
      %p284 = scmp.eq.s32.totalorder %s48, 5
      %p285 = por %p283, %p284
      %p286 = scmp.ne.s32.totalorder %s278, %s281
      %p287 = scmp.eq.s32.totalorder %s48, 0
      %p288 = por %p286, %p287
      %p289 = scmp.ne.s32.totalorder %s278, %s281
      %p290 = scmp.eq.s32.totalorder %s53, 5
      %p291 = por %p289, %p290
      %p292 = scmp.ne.s32.totalorder %s281, %s282
      %p293 = scmp.eq.s32.totalorder %s53, 0
      %p294 = por %p292, %p293
      %p295 = scmp.ne.s32.totalorder %s281, %s282
      %p296 = scmp.eq.s32.totalorder %s54, 5
      %p297 = por %p295, %p296
      %p299 = scmp.ne.s32.totalorder %s282, %s298
      %p300 = scmp.eq.s32.totalorder %s54, 0
      %p301 = por %p299, %p300
      %s302 = ssub.s32 %s56, %s63
      %p303 = scmp.eq.s32.totalorder %s302, 0
      %s305 = sadd.s32 %s304, 1
      %s306 = scalar_select %p303, %s304, %s305
      %p309 = pneg %p303
      %p310 = scmp.eq.s32.totalorder %s48, 5
      %p311 = por %p309, %p310
      %p312 = scmp.ne.s32.totalorder %s304, %s307
      %p313 = scmp.eq.s32.totalorder %s48, 0
      %p314 = por %p312, %p313
      %p315 = scmp.ne.s32.totalorder %s304, %s307
      %p316 = scmp.eq.s32.totalorder %s53, 5
      %p317 = por %p315, %p316
      %p318 = scmp.ne.s32.totalorder %s307, %s308
      %p319 = scmp.eq.s32.totalorder %s53, 0
      %p320 = por %p318, %p319
      %p321 = scmp.ne.s32.totalorder %s307, %s308
      %p322 = scmp.eq.s32.totalorder %s54, 5
      %p323 = por %p321, %p322
      %p325 = scmp.ne.s32.totalorder %s308, %s324
      %p326 = scmp.eq.s32.totalorder %s54, 0
      %p327 = por %p325, %p326
      %s328 = ssub.s32 %s56, %s63
      %p329 = scmp.eq.s32.totalorder %s328, 0
      %s331 = sadd.s32 %s330, 1
      %s332 = scalar_select %p329, %s330, %s331
      %p335 = pneg %p329
      %p336 = scmp.eq.s32.totalorder %s48, 5
      %p337 = por %p335, %p336
      %p338 = scmp.ne.s32.totalorder %s330, %s333
      %p339 = scmp.eq.s32.totalorder %s48, 0
      %p340 = por %p338, %p339
      %p341 = scmp.ne.s32.totalorder %s330, %s333
      %p342 = scmp.eq.s32.totalorder %s53, 5
      %p343 = por %p341, %p342
      %p344 = scmp.ne.s32.totalorder %s333, %s334
      %p345 = scmp.eq.s32.totalorder %s53, 0
      %p346 = por %p344, %p345
      %p347 = scmp.ne.s32.totalorder %s333, %s334
      %p348 = scmp.eq.s32.totalorder %s54, 5
      %p349 = por %p347, %p348
      %p351 = scmp.ne.s32.totalorder %s334, %s350
      %p352 = scmp.eq.s32.totalorder %s54, 0
      %p353 = por %p351, %p352
      %s354 = ssub.s32 %s56, %s63
      %p355 = scmp.eq.s32.totalorder %s354, 0
      %s357 = sadd.s32 %s356, 1
      %s358 = scalar_select %p355, %s356, %s357
      %p361 = pneg %p355
      %p362 = scmp.eq.s32.totalorder %s48, 5
      %p363 = por %p361, %p362
      %p364 = scmp.ne.s32.totalorder %s356, %s359
      %p365 = scmp.eq.s32.totalorder %s48, 0
      %p366 = por %p364, %p365
      %p367 = scmp.ne.s32.totalorder %s356, %s359
      %p368 = scmp.eq.s32.totalorder %s53, 5
      %p369 = por %p367, %p368
      %p370 = scmp.ne.s32.totalorder %s359, %s360
      %p371 = scmp.eq.s32.totalorder %s53, 0
      %p372 = por %p370, %p371
      %p373 = scmp.ne.s32.totalorder %s359, %s360
      %p374 = scmp.eq.s32.totalorder %s54, 5
      %p375 = por %p373, %p374
      %p377 = scmp.ne.s32.totalorder %s360, %s376
      %p378 = scmp.eq.s32.totalorder %s54, 0
      %p379 = por %p377, %p378
      %s381 = sadd.s32 %s380, 1
      %p384 = scmp.eq.s32.totalorder %s48, 5
      %p385 = scmp.ne.s32.totalorder %s380, %s382
      %p386 = scmp.eq.s32.totalorder %s48, 0
      %p387 = por %p385, %p386
      %p388 = scmp.ne.s32.totalorder %s380, %s382
      %p389 = scmp.eq.s32.totalorder %s53, 5
      %p390 = por %p388, %p389
      %p391 = scmp.ne.s32.totalorder %s382, %s383
      %p392 = scmp.eq.s32.totalorder %s53, 0
      %p393 = por %p391, %p392
      %p394 = scmp.ne.s32.totalorder %s382, %s383
      %p395 = scmp.eq.s32.totalorder %s54, 5
      %p396 = por %p394, %p395
      %p398 = scmp.ne.s32.totalorder %s383, %s397
      %p399 = scmp.eq.s32.totalorder %s54, 0
      %p400 = por %p398, %p399
      %s402 = sadd.s32 %s401, 1
      %p405 = scmp.eq.s32.totalorder %s48, 5
      %p406 = scmp.ne.s32.totalorder %s401, %s403
      %p407 = scmp.eq.s32.totalorder %s48, 0
      %p408 = por %p406, %p407
      %p409 = scmp.ne.s32.totalorder %s401, %s403
      %p410 = scmp.eq.s32.totalorder %s53, 5
      %p411 = por %p409, %p410
      %p412 = scmp.ne.s32.totalorder %s403, %s404
      %p413 = scmp.eq.s32.totalorder %s53, 0
      %p414 = por %p412, %p413
      %p415 = scmp.ne.s32.totalorder %s403, %s404
      %p416 = scmp.eq.s32.totalorder %s54, 5
      %p417 = por %p415, %p416
      %p419 = scmp.ne.s32.totalorder %s404, %s418
      %p420 = scmp.eq.s32.totalorder %s54, 0
      %p421 = por %p419, %p420
      %s422 = ssub.s32 %s56, %s63
      %p423 = scmp.eq.s32.totalorder %s422, 0
      %s425 = sadd.s32 %s424, 1
      %s426 = scalar_select %p423, %s424, %s425
      %p429 = pneg %p423
      %p430 = scmp.eq.s32.totalorder %s48, 5
      %p431 = por %p429, %p430
      %p432 = scmp.ne.s32.totalorder %s424, %s427
      %p433 = scmp.eq.s32.totalorder %s48, 0
      %p434 = por %p432, %p433
      %p435 = scmp.ne.s32.totalorder %s424, %s427
      %p436 = scmp.eq.s32.totalorder %s53, 5
      %p437 = por %p435, %p436
      %p438 = scmp.ne.s32.totalorder %s427, %s428
      %p439 = scmp.eq.s32.totalorder %s53, 0
      %p440 = por %p438, %p439
      %p441 = scmp.ne.s32.totalorder %s427, %s428
      %p442 = scmp.eq.s32.totalorder %s54, 5
      %p443 = por %p441, %p442
      %p445 = scmp.ne.s32.totalorder %s428, %s444
      %p446 = scmp.eq.s32.totalorder %s54, 0
      %p447 = por %p445, %p446
      %s448 = ssub.s32 %s56, %s63
      %p449 = scmp.eq.s32.totalorder %s448, 0
      %s451 = sadd.s32 %s450, 1
      %s452 = scalar_select %p449, %s450, %s451
      %p455 = pneg %p449
      %p456 = scmp.eq.s32.totalorder %s48, 5
      %p457 = por %p455, %p456
      %p458 = scmp.ne.s32.totalorder %s450, %s453
      %p459 = scmp.eq.s32.totalorder %s48, 0
      %p460 = por %p458, %p459
      %p461 = scmp.ne.s32.totalorder %s450, %s453
      %p462 = scmp.eq.s32.totalorder %s53, 5
      %p463 = por %p461, %p462
      %p464 = scmp.ne.s32.totalorder %s453, %s454
      %p465 = scmp.eq.s32.totalorder %s53, 0
      %p466 = por %p464, %p465
      %p467 = scmp.ne.s32.totalorder %s453, %s454
      %p468 = scmp.eq.s32.totalorder %s54, 5
      %p469 = por %p467, %p468
      %p471 = scmp.ne.s32.totalorder %s454, %s470
      %p472 = scmp.eq.s32.totalorder %s54, 0
      %p473 = por %p471, %p472
      %s474 = ssub.s32 %s56, %s63
      %p475 = scmp.eq.s32.totalorder %s474, 0
      %s477 = sadd.s32 %s476, 1
      %s478 = scalar_select %p475, %s476, %s477
      %p481 = pneg %p475
      %p482 = scmp.eq.s32.totalorder %s48, 5
      %p483 = por %p481, %p482
      %p484 = scmp.ne.s32.totalorder %s476, %s479
      %p485 = scmp.eq.s32.totalorder %s48, 0
      %p486 = por %p484, %p485
      %p487 = scmp.ne.s32.totalorder %s476, %s479
      %p488 = scmp.eq.s32.totalorder %s53, 5
      %p489 = por %p487, %p488
      %p490 = scmp.ne.s32.totalorder %s479, %s480
      %p491 = scmp.eq.s32.totalorder %s53, 0
      %p492 = por %p490, %p491
      %p493 = scmp.ne.s32.totalorder %s479, %s480
      %p494 = scmp.eq.s32.totalorder %s54, 5
      %p495 = por %p493, %p494
      %p497 = scmp.ne.s32.totalorder %s480, %s496
      %p498 = scmp.eq.s32.totalorder %s54, 0
      %p499 = por %p497, %p498
      %s500 = ssub.s32 %s56, %s63
      %p501 = scmp.eq.s32.totalorder %s500, 0
      %s503 = sadd.s32 %s502, 1
      %s504 = scalar_select %p501, %s502, %s503
      %p507 = pneg %p501
      %p508 = scmp.eq.s32.totalorder %s48, 5
      %p509 = por %p507, %p508
      %p510 = scmp.ne.s32.totalorder %s502, %s505
      %p511 = scmp.eq.s32.totalorder %s48, 0
      %p512 = por %p510, %p511
      %p513 = scmp.ne.s32.totalorder %s502, %s505
      %p514 = scmp.eq.s32.totalorder %s53, 5
      %p515 = por %p513, %p514
      %p516 = scmp.ne.s32.totalorder %s505, %s506
      %p517 = scmp.eq.s32.totalorder %s53, 0
      %p518 = por %p516, %p517
      %p519 = scmp.ne.s32.totalorder %s505, %s506
      %p520 = scmp.eq.s32.totalorder %s54, 5
      %p521 = por %p519, %p520
      %p523 = scmp.ne.s32.totalorder %s506, %s522
      %p524 = scmp.eq.s32.totalorder %s54, 0
      %p525 = por %p523, %p524
      %s526 = ssub.s32 %s56, %s63
      %p527 = scmp.eq.s32.totalorder %s526, 0
      %s529 = sadd.s32 %s528, 1
      %s530 = scalar_select %p527, %s528, %s529
      %p533 = pneg %p527
      %p534 = scmp.eq.s32.totalorder %s48, 5
      %p535 = por %p533, %p534
      %p536 = scmp.ne.s32.totalorder %s528, %s531
      %p537 = scmp.eq.s32.totalorder %s48, 0
      %p538 = por %p536, %p537
      %p539 = scmp.ne.s32.totalorder %s528, %s531
      %p540 = scmp.eq.s32.totalorder %s53, 5
      %p541 = por %p539, %p540
      %p542 = scmp.ne.s32.totalorder %s531, %s532
      %p543 = scmp.eq.s32.totalorder %s53, 0
      %p544 = por %p542, %p543
      %p545 = scmp.ne.s32.totalorder %s531, %s532
      %p546 = scmp.eq.s32.totalorder %s54, 5
      %p547 = por %p545, %p546
      %p549 = scmp.ne.s32.totalorder %s532, %s548
      %p550 = scmp.eq.s32.totalorder %s54, 0
      %p551 = por %p549, %p550
      %s552 = ssub.s32 %s56, %s63
      %p553 = scmp.eq.s32.totalorder %s552, 0
      %s555 = sadd.s32 %s554, 1
      %s556 = scalar_select %p553, %s554, %s555
      %p559 = pneg %p553
      %p560 = scmp.eq.s32.totalorder %s48, 5
      %p561 = por %p559, %p560
      %p562 = scmp.ne.s32.totalorder %s554, %s557
      %p563 = scmp.eq.s32.totalorder %s48, 0
      %p564 = por %p562, %p563
      %p565 = scmp.ne.s32.totalorder %s554, %s557
      %p566 = scmp.eq.s32.totalorder %s53, 5
      %p567 = por %p565, %p566
      %p568 = scmp.ne.s32.totalorder %s557, %s558
      %p569 = scmp.eq.s32.totalorder %s53, 0
      %p570 = por %p568, %p569
      %p571 = scmp.ne.s32.totalorder %s557, %s558
      %p572 = scmp.eq.s32.totalorder %s54, 5
      %p573 = por %p571, %p572
      %p575 = scmp.ne.s32.totalorder %s558, %s574
      %p576 = scmp.eq.s32.totalorder %s54, 0
      %p577 = por %p575, %p576
      %s579 = sadd.s32 %s578, 1
      %p582 = scmp.eq.s32.totalorder %s48, 5
      %p583 = scmp.ne.s32.totalorder %s578, %s580
      %p584 = scmp.eq.s32.totalorder %s48, 0
      %p585 = por %p583, %p584
      %p586 = scmp.ne.s32.totalorder %s578, %s580
      %p587 = scmp.eq.s32.totalorder %s53, 5
      %p588 = por %p586, %p587
      %p589 = scmp.ne.s32.totalorder %s580, %s581
      %p590 = scmp.eq.s32.totalorder %s53, 0
      %p591 = por %p589, %p590
      %p592 = scmp.ne.s32.totalorder %s580, %s581
      %p593 = scmp.eq.s32.totalorder %s54, 5
      %p594 = por %p592, %p593
      %p596 = scmp.ne.s32.totalorder %s581, %s595
      %p597 = scmp.eq.s32.totalorder %s54, 0
      %p598 = por %p596, %p597
      %s600 = sadd.s32 %s599, 1
      %p603 = scmp.eq.s32.totalorder %s48, 5
      %p604 = scmp.ne.s32.totalorder %s599, %s601
      %p605 = scmp.eq.s32.totalorder %s48, 0
      %p606 = por %p604, %p605
      %p607 = scmp.ne.s32.totalorder %s599, %s601
      %p608 = scmp.eq.s32.totalorder %s53, 5
      %p609 = por %p607, %p608
      %p610 = scmp.ne.s32.totalorder %s601, %s602
      %p611 = scmp.eq.s32.totalorder %s53, 0
      %p612 = por %p610, %p611
      %p613 = scmp.ne.s32.totalorder %s601, %s602
      %p614 = scmp.eq.s32.totalorder %s54, 5
      %p615 = por %p613, %p614
      %p617 = scmp.ne.s32.totalorder %s602, %s616
      %p618 = scmp.eq.s32.totalorder %s54, 0
      %p619 = por %p617, %p618
      %s620 = ssub.s32 %s55, %s67
      %p621 = scmp.eq.s32.totalorder %s620, 0
      %s623 = sadd.s32 %s622, 1
      %s624 = scalar_select %p621, %s622, %s623
      %p627 = pneg %p621
      %p628 = scmp.eq.s32.totalorder %s48, 5
      %p629 = por %p627, %p628
      %p630 = scmp.ne.s32.totalorder %s622, %s625
      %p631 = scmp.eq.s32.totalorder %s48, 0
      %p632 = por %p630, %p631
      %p633 = scmp.ne.s32.totalorder %s622, %s625
      %p634 = scmp.eq.s32.totalorder %s53, 5
      %p635 = por %p633, %p634
      %p636 = scmp.ne.s32.totalorder %s625, %s626
      %p637 = scmp.eq.s32.totalorder %s53, 0
      %p638 = por %p636, %p637
      %p639 = scmp.ne.s32.totalorder %s625, %s626
      %p640 = scmp.eq.s32.totalorder %s54, 5
      %p641 = por %p639, %p640
      %p643 = scmp.ne.s32.totalorder %s626, %s642
      %p644 = scmp.eq.s32.totalorder %s54, 0
      %p645 = por %p643, %p644
      %s646 = ssub.s32 %s55, %s67
      %p647 = scmp.eq.s32.totalorder %s646, 0
      %s649 = sadd.s32 %s648, 1
      %s650 = scalar_select %p647, %s648, %s649
      %p653 = pneg %p647
      %p654 = scmp.eq.s32.totalorder %s48, 5
      %p655 = por %p653, %p654
      %p656 = scmp.ne.s32.totalorder %s648, %s651
      %p657 = scmp.eq.s32.totalorder %s48, 0
      %p658 = por %p656, %p657
      %p659 = scmp.ne.s32.totalorder %s648, %s651
      %p660 = scmp.eq.s32.totalorder %s53, 5
      %p661 = por %p659, %p660
      %p662 = scmp.ne.s32.totalorder %s651, %s652
      %p663 = scmp.eq.s32.totalorder %s53, 0
      %p664 = por %p662, %p663
      %p665 = scmp.ne.s32.totalorder %s651, %s652
      %p666 = scmp.eq.s32.totalorder %s54, 5
      %p667 = por %p665, %p666
      %p669 = scmp.ne.s32.totalorder %s652, %s668
      %p670 = scmp.eq.s32.totalorder %s54, 0
      %p671 = por %p669, %p670
      %p672 = scmp.le.s32.totalorder 1, %s48
      %p673 = scmp.lt.s32.totalorder %s48, 7
      %p674 = pnand %p672, %p673
      %p675 = pneg %p674
      // Predicated region
      $region9: #{tpu_custom_call.1} parent=5 // pred_check
        _
      $region10: #{tpu_custom_call.1} parent=5 // pred_check_branch
        %677 = sbr.rel (%p674) target = $region12
      $region11: #{tpu_custom_call.1} parent=5 // pred_region
        %s678 = ssub.s32 %s48, 1
        // Predicated region
        $region13: #{tpu_custom_call.1} parent=11 // pred_check
          %p679 = pneg %p393
        $region14: #{tpu_custom_call.1} parent=11 // pred_check_branch
          %681 = sbr.rel (%p679) target = $region16
        $region15: #{tpu_custom_call.1} parent=11 // pred_region
          _
        $region16: #{tpu_custom_call.1} parent=11 // pred_fallthru
          _
        // Predicated region
        $region17: #{tpu_custom_call.1} parent=11 // pred_check
          %p682 = pneg %p414
        $region18: #{tpu_custom_call.1} parent=11 // pred_check_branch
          %684 = sbr.rel (%p682) target = $region20
        $region19: #{tpu_custom_call.1} parent=11 // pred_region
          _
        $region20: #{tpu_custom_call.1} parent=11 // pred_fallthru
          _
        // Predicated region
        $region21: #{tpu_custom_call.1} parent=11 // pred_check
          %p685 = pneg %p591
        $region22: #{tpu_custom_call.1} parent=11 // pred_check_branch
          %687 = sbr.rel (%p685) target = $region24
        $region23: #{tpu_custom_call.1} parent=11 // pred_region
          _
        $region24: #{tpu_custom_call.1} parent=11 // pred_fallthru
          _
        // Predicated region
        $region25: #{tpu_custom_call.1} parent=11 // pred_check
          %p688 = pneg %p612
        $region26: #{tpu_custom_call.1} parent=11 // pred_check_branch
          %690 = sbr.rel (%p688) target = $region28
        $region27: #{tpu_custom_call.1} parent=11 // pred_region
          _
        $region28: #{tpu_custom_call.1} parent=11 // pred_fallthru
          _
      $region12: #{tpu_custom_call.1} parent=5 // pred_fallthru
        _
      %p691 = scmp.lt.s32.totalorder %s48, 6
      // Predicated region
      $region29: #{tpu_custom_call.1} parent=5 // pred_check
        %p692 = pneg %p691
      $region30: #{tpu_custom_call.1} parent=5 // pred_check_branch
        %694 = sbr.rel (%p692) target = $region32
      $region31: #{tpu_custom_call.1} parent=5 // pred_region
        // Predicated region
        $region33: #{tpu_custom_call.1} parent=31 // pred_check
          %p695 = pneg %p80
        $region34: #{tpu_custom_call.1} parent=31 // pred_check_branch
          %697 = sbr.rel (%p695) target = $region36
        $region35: #{tpu_custom_call.1} parent=31 // pred_region
          %p698 = scmp.lt.s32.totalorder %s55, 1
          %s699 = scalar_select %p698, %s55, 1
          %s700 = smul.addr %s699, 8
          %s701 = scalar_lea.vmem %s0, %s700
        $region36: #{tpu_custom_call.1} parent=31 // pred_fallthru
          _
        // Predicated region
        $region37: #{tpu_custom_call.1} parent=31 // pred_check
          %p702 = pneg %p106
        $region38: #{tpu_custom_call.1} parent=31 // pred_check_branch
          %704 = sbr.rel (%p702) target = $region40
        $region39: #{tpu_custom_call.1} parent=31 // pred_region
          %p705 = scmp.lt.s32.totalorder %s55, 1
          %s706 = scalar_select %p705, %s55, 1
          %s707 = scalar_lea.vmem %s1, %s706
        $region40: #{tpu_custom_call.1} parent=31 // pred_fallthru
          _
        // Predicated region
        $region41: #{tpu_custom_call.1} parent=31 // pred_check
          %p708 = pneg %p132
        $region42: #{tpu_custom_call.1} parent=31 // pred_check_branch
          %710 = sbr.rel (%p708) target = $region44
        $region43: #{tpu_custom_call.1} parent=31 // pred_region
          %p711 = scmp.lt.s32.totalorder %s56, 2
          %s712 = scalar_select %p711, %s56, 2
          %s713 = scalar_lea.vmem %s2, %s712
        $region44: #{tpu_custom_call.1} parent=31 // pred_fallthru
          _
        // Predicated region
        $region45: #{tpu_custom_call.1} parent=31 // pred_check
          %p714 = pneg %p158
        $region46: #{tpu_custom_call.1} parent=31 // pred_check_branch
          %716 = sbr.rel (%p714) target = $region48
        $region47: #{tpu_custom_call.1} parent=31 // pred_region
          %p717 = scmp.lt.s32.totalorder %s56, 2
          %s718 = scalar_select %p717, %s56, 2
          %s719 = scalar_lea.vmem %s3, %s718
        $region48: #{tpu_custom_call.1} parent=31 // pred_fallthru
          _
        // Predicated region
        $region49: #{tpu_custom_call.1} parent=31 // pred_check
          %p720 = pneg %p184
        $region50: #{tpu_custom_call.1} parent=31 // pred_check_branch
          %722 = sbr.rel (%p720) target = $region52
        $region51: #{tpu_custom_call.1} parent=31 // pred_region
          %s723 = sand.u32 %s174, 1
          %s724 = scalar_lea.sflag [#allocation3], %s723
          %s725 = sand.u32 %s174, 1
          %s726 = smul.addr %s725, 64
          %s727 = scalar_lea.vmem [#allocation2], %s726
          %s729 = ssub.s32 1024, 1024
          %730 = vsyncadd %s724, %s729
          %s731 = smul.addr %s56, 16
          %s732 = smul.addr %s731, 64
          %s733 = scalar_lea.hbm %s4, %s732
          %s734 = sshll.u32 %s727, 4
          %s735 = int_to_ptr.vmem [resolvable:$true] %s734
          %740 = dma.hbm_to_vmem [thread:$0]  %s733, 1024, %s735, %s724, 64, 64, 4
        $region52: #{tpu_custom_call.1} parent=31 // pred_fallthru
          _
        // Predicated region
        $region53: #{tpu_custom_call.1} parent=31 // pred_check
          %p741 = pneg %p210
        $region54: #{tpu_custom_call.1} parent=31 // pred_check_branch
          %743 = sbr.rel (%p741) target = $region56
        $region55: #{tpu_custom_call.1} parent=31 // pred_region
          %s744 = sand.u32 %s48, 1
          %s745 = scalar_lea.sflag [#allocation6], %s744
          %s746 = sand.u32 %s200, 1
          %s747 = smul.addr %s746, 64
          %s748 = scalar_lea.vmem [#allocation5], %s747
          %s750 = ssub.s32 1024, 1024
          %751 = vsyncadd %s745, %s750
          %s752 = smul.addr %s56, 16
          %s753 = smul.addr %s752, 64
          %s754 = scalar_lea.hbm %s5, %s753
          %s755 = sshll.u32 %s748, 4
          %s756 = int_to_ptr.vmem [resolvable:$true] %s755
          %761 = dma.hbm_to_vmem [thread:$0]  %s754, 1024, %s756, %s745, 64, 64, 4
        $region56: #{tpu_custom_call.1} parent=31 // pred_fallthru
          _
        // Predicated region
        $region57: #{tpu_custom_call.1} parent=31 // pred_check
          %p762 = pneg %p236
        $region58: #{tpu_custom_call.1} parent=31 // pred_check_branch
          %764 = sbr.rel (%p762) target = $region60
        $region59: #{tpu_custom_call.1} parent=31 // pred_region
          %s765 = sand.u32 %s48, 1
          %s766 = scalar_lea.sflag [#allocation6], %s765
          %s767 = sand.u32 %s226, 1
          %s768 = smul.addr %s767, 64
          %s769 = scalar_lea.vmem [#allocation7], %s768
          %s771 = ssub.s32 1024, 1024
          %772 = vsyncadd %s766, %s771
          %s773 = smul.addr %s56, 16
          %s774 = smul.addr %s773, 64
          %s775 = scalar_lea.hbm %s6, %s774
          %s776 = sshll.u32 %s769, 4
          %s777 = int_to_ptr.vmem [resolvable:$true] %s776
          %782 = dma.hbm_to_vmem [thread:$0]  %s775, 1024, %s777, %s766, 64, 64, 4
        $region60: #{tpu_custom_call.1} parent=31 // pred_fallthru
          _
        // Predicated region
        $region61: #{tpu_custom_call.1} parent=31 // pred_check
          %p783 = pneg %p262
        $region62: #{tpu_custom_call.1} parent=31 // pred_check_branch
          %785 = sbr.rel (%p783) target = $region64
        $region63: #{tpu_custom_call.1} parent=31 // pred_region
          %p786 = scmp.lt.s32.totalorder %s56, 2
          %s787 = scalar_select %p786, %s56, 2
          %s788 = scalar_lea.vmem %s7, %s787
        $region64: #{tpu_custom_call.1} parent=31 // pred_fallthru
          _
        // Predicated region
        $region65: #{tpu_custom_call.1} parent=31 // pred_check
          %p789 = pneg %p288
        $region66: #{tpu_custom_call.1} parent=31 // pred_check_branch
          %791 = sbr.rel (%p789) target = $region68
        $region67: #{tpu_custom_call.1} parent=31 // pred_region
          %p792 = scmp.lt.s32.totalorder %s56, 2
          %s793 = scalar_select %p792, %s56, 2
          %s794 = scalar_lea.vmem %s8, %s793
        $region68: #{tpu_custom_call.1} parent=31 // pred_fallthru
          _
        // Predicated region
        $region69: #{tpu_custom_call.1} parent=31 // pred_check
          %p795 = pneg %p314
        $region70: #{tpu_custom_call.1} parent=31 // pred_check_branch
          %797 = sbr.rel (%p795) target = $region72
        $region71: #{tpu_custom_call.1} parent=31 // pred_region
          %p798 = scmp.lt.s32.totalorder %s56, 2
          %s799 = scalar_select %p798, %s56, 2
          %s800 = scalar_lea.vmem %s9, %s799
        $region72: #{tpu_custom_call.1} parent=31 // pred_fallthru
          _
        // Predicated region
        $region73: #{tpu_custom_call.1} parent=31 // pred_check
          %p801 = pneg %p340
        $region74: #{tpu_custom_call.1} parent=31 // pred_check_branch
          %803 = sbr.rel (%p801) target = $region76
        $region75: #{tpu_custom_call.1} parent=31 // pred_region
          %s804 = sand.u32 %s48, 1
          %s805 = scalar_lea.sflag [#allocation9], %s804
          %s806 = sand.u32 %s330, 1
          %s807 = smul.addr %s806, 64
          %s808 = scalar_lea.vmem [#allocation8], %s807
          %s810 = ssub.s32 1024, 1024
          %811 = vsyncadd %s805, %s810
          %s812 = smul.addr %s56, 16
          %s813 = smul.addr %s812, 64
          %s814 = scalar_lea.hbm %s10, %s813
          %s815 = sshll.u32 %s808, 4
          %s816 = int_to_ptr.vmem [resolvable:$true] %s815
          %821 = dma.hbm_to_vmem [thread:$0]  %s814, 1024, %s816, %s805, 64, 64, 4
        $region76: #{tpu_custom_call.1} parent=31 // pred_fallthru
          _
        // Predicated region
        $region77: #{tpu_custom_call.1} parent=31 // pred_check
          %p822 = pneg %p366
        $region78: #{tpu_custom_call.1} parent=31 // pred_check_branch
          %824 = sbr.rel (%p822) target = $region80
        $region79: #{tpu_custom_call.1} parent=31 // pred_region
          %p825 = scmp.lt.s32.totalorder %s56, 2
          %s826 = scalar_select %p825, %s56, 2
          %s827 = scalar_lea.vmem %s11, %s826
        $region80: #{tpu_custom_call.1} parent=31 // pred_fallthru
          _
        // Predicated region
        $region81: #{tpu_custom_call.1} parent=31 // pred_check
          %p828 = pneg %p434
        $region82: #{tpu_custom_call.1} parent=31 // pred_check_branch
          %830 = sbr.rel (%p828) target = $region84
        $region83: #{tpu_custom_call.1} parent=31 // pred_region
          %p831 = scmp.lt.s32.totalorder %s56, 2
          %s832 = scalar_select %p831, %s56, 2
          %s833 = scalar_lea.vmem %s14, %s832
        $region84: #{tpu_custom_call.1} parent=31 // pred_fallthru
          _
        // Predicated region
        $region85: #{tpu_custom_call.1} parent=31 // pred_check
          %p834 = pneg %p460
        $region86: #{tpu_custom_call.1} parent=31 // pred_check_branch
          %836 = sbr.rel (%p834) target = $region88
        $region87: #{tpu_custom_call.1} parent=31 // pred_region
          %p837 = scmp.lt.s32.totalorder %s56, 2
          %s838 = scalar_select %p837, %s56, 2
          %s839 = scalar_lea.vmem %s15, %s838
        $region88: #{tpu_custom_call.1} parent=31 // pred_fallthru
          _
        // Predicated region
        $region89: #{tpu_custom_call.1} parent=31 // pred_check
          %p840 = pneg %p486
        $region90: #{tpu_custom_call.1} parent=31 // pred_check_branch
          %842 = sbr.rel (%p840) target = $region92
        $region91: #{tpu_custom_call.1} parent=31 // pred_region
          %s843 = sand.u32 %s48, 1
          %s844 = scalar_lea.sflag [#allocation9], %s843
          %s845 = sand.u32 %s476, 1
          %s846 = smul.addr %s845, 256
          %s847 = scalar_lea.vmem [#allocation10], %s846
          %s849 = ssub.s32 4096, 4096
          %850 = vsyncadd %s844, %s849
          %s851 = smul.addr %s56, 64
          %s852 = smul.addr %s851, 64
          %s853 = scalar_lea.hbm %s16, %s852
          %s854 = sshll.u32 %s847, 4
          %s855 = int_to_ptr.vmem [resolvable:$true] %s854
          %860 = dma.hbm_to_vmem [thread:$0]  %s853, 4096, %s855, %s844, 256, 256, 16
        $region92: #{tpu_custom_call.1} parent=31 // pred_fallthru
          _
        // Predicated region
        $region93: #{tpu_custom_call.1} parent=31 // pred_check
          %p861 = pneg %p512
        $region94: #{tpu_custom_call.1} parent=31 // pred_check_branch
          %863 = sbr.rel (%p861) target = $region96
        $region95: #{tpu_custom_call.1} parent=31 // pred_region
          %p864 = scmp.lt.s32.totalorder %s56, 2
          %s865 = scalar_select %p864, %s56, 2
          %s866 = smul.addr %s865, 4
          %s867 = scalar_lea.vmem %s17, %s866
        $region96: #{tpu_custom_call.1} parent=31 // pred_fallthru
          _
        // Predicated region
        $region97: #{tpu_custom_call.1} parent=31 // pred_check
          %p868 = pneg %p538
        $region98: #{tpu_custom_call.1} parent=31 // pred_check_branch
          %870 = sbr.rel (%p868) target = $region100
        $region99: #{tpu_custom_call.1} parent=31 // pred_region
          %s871 = sand.u32 %s528, 1
          %s872 = scalar_lea.sflag [#allocation12], %s871
          %s873 = sand.u32 %s528, 1
          %s874 = smul.addr %s873, 256
          %s875 = scalar_lea.vmem [#allocation11], %s874
          %s877 = ssub.s32 4096, 4096
          %878 = vsyncadd %s872, %s877
          %s879 = smul.addr %s56, 64
          %s880 = smul.addr %s879, 64
          %s881 = scalar_lea.hbm %s18, %s880
          %s882 = sshll.u32 %s875, 4
          %s883 = int_to_ptr.vmem [resolvable:$true] %s882
          %888 = dma.hbm_to_vmem [thread:$0]  %s881, 4096, %s883, %s872, 64, 64, 4
        $region100: #{tpu_custom_call.1} parent=31 // pred_fallthru
          _
        // Predicated region
        $region101: #{tpu_custom_call.1} parent=31 // pred_check
          %p889 = pneg %p564
        $region102: #{tpu_custom_call.1} parent=31 // pred_check_branch
          %891 = sbr.rel (%p889) target = $region104
        $region103: #{tpu_custom_call.1} parent=31 // pred_region
          %p892 = scmp.lt.s32.totalorder %s56, 2
          %s893 = scalar_select %p892, %s56, 2
          %s894 = scalar_lea.vmem %s19, %s893
        $region104: #{tpu_custom_call.1} parent=31 // pred_fallthru
          _
      $region32: #{tpu_custom_call.1} parent=5 // pred_fallthru
        _
      %p895 = scmp.le.s32.totalorder 1, %s48
      %p896 = scmp.lt.s32.totalorder %s48, 7
      %p897 = pnand %p895, %p896
      %p898 = pneg %p897
      // Predicated region
      $region105: #{tpu_custom_call.1} parent=5 // pred_check
        _
      $region106: #{tpu_custom_call.1} parent=5 // pred_check_branch
        %900 = sbr.rel (%p897) target = $region108
      $region107: #{tpu_custom_call.1} parent=5 // pred_region
        %s901 = ssub.s32 %s48, 1
        %s902 = sand.u32 %s177, 1
        %s903 = scalar_lea.sflag [#allocation3], %s902
        %s904 = sand.u32 %s177, 1
        %s905 = smul.addr %s904, 64
        %s906 = scalar_lea.vmem [#allocation2], %s905
        // Predicated region
        $region109: #{tpu_custom_call.1} parent=107 // pred_check
          %p907 = pneg %p190
        $region110: #{tpu_custom_call.1} parent=107 // pred_check_branch
          %909 = sbr.rel (%p907) target = $region112
        $region111: #{tpu_custom_call.1} parent=107 // pred_region
          %910 = dma.done %s903, 1024
        $region112: #{tpu_custom_call.1} parent=107 // pred_fallthru
          _
        %s911 = sand.u32 %s53, 1
        %s912 = scalar_lea.sflag [#allocation6], %s911
        %s913 = sand.u32 %s203, 1
        %s914 = smul.addr %s913, 64
        %s915 = scalar_lea.vmem [#allocation5], %s914
        // Predicated region
        $region113: #{tpu_custom_call.1} parent=107 // pred_check
          %p916 = pneg %p216
        $region114: #{tpu_custom_call.1} parent=107 // pred_check_branch
          %918 = sbr.rel (%p916) target = $region116
        $region115: #{tpu_custom_call.1} parent=107 // pred_region
          %919 = dma.done %s912, 1024
        $region116: #{tpu_custom_call.1} parent=107 // pred_fallthru
          _
        %s920 = sand.u32 %s53, 1
        %s921 = scalar_lea.sflag [#allocation6], %s920
        %s922 = sand.u32 %s229, 1
        %s923 = smul.addr %s922, 64
        %s924 = scalar_lea.vmem [#allocation7], %s923
        // Predicated region
        $region117: #{tpu_custom_call.1} parent=107 // pred_check
          %p925 = pneg %p242
        $region118: #{tpu_custom_call.1} parent=107 // pred_check_branch
          %927 = sbr.rel (%p925) target = $region120
        $region119: #{tpu_custom_call.1} parent=107 // pred_region
          %928 = dma.done %s921, 1024
        $region120: #{tpu_custom_call.1} parent=107 // pred_fallthru
          _
        %s929 = sand.u32 %s53, 1
        %s930 = scalar_lea.sflag [#allocation9], %s929
        %s931 = sand.u32 %s333, 1
        %s932 = smul.addr %s931, 64
        %s933 = scalar_lea.vmem [#allocation8], %s932
        // Predicated region
        $region121: #{tpu_custom_call.1} parent=107 // pred_check
          %p934 = pneg %p346
        $region122: #{tpu_custom_call.1} parent=107 // pred_check_branch
          %936 = sbr.rel (%p934) target = $region124
        $region123: #{tpu_custom_call.1} parent=107 // pred_region
          %937 = dma.done %s930, 1024
        $region124: #{tpu_custom_call.1} parent=107 // pred_fallthru
          _
        %s938 = sand.u32 %s53, 1
        %s939 = scalar_lea.sflag [#allocation9], %s938
        %s940 = sand.u32 %s479, 1
        %s941 = smul.addr %s940, 256
        %s942 = scalar_lea.vmem [#allocation10], %s941
        // Predicated region
        $region125: #{tpu_custom_call.1} parent=107 // pred_check
          %p943 = pneg %p492
        $region126: #{tpu_custom_call.1} parent=107 // pred_check_branch
          %945 = sbr.rel (%p943) target = $region128
        $region127: #{tpu_custom_call.1} parent=107 // pred_region
          %946 = dma.done %s939, 4096
        $region128: #{tpu_custom_call.1} parent=107 // pred_fallthru
          _
        %s947 = sand.u32 %s531, 1
        %s948 = scalar_lea.sflag [#allocation12], %s947
        %s949 = sand.u32 %s531, 1
        %s950 = smul.addr %s949, 256
        %s951 = scalar_lea.vmem [#allocation11], %s950
        // Predicated region
        $region129: #{tpu_custom_call.1} parent=107 // pred_check
          %p952 = pneg %p544
        $region130: #{tpu_custom_call.1} parent=107 // pred_check_branch
          %954 = sbr.rel (%p952) target = $region132
        $region131: #{tpu_custom_call.1} parent=107 // pred_region
          %955 = dma.done %s948, 4096
        $region132: #{tpu_custom_call.1} parent=107 // pred_fallthru
          _
        %p956 = scmp.lt.s32.totalorder %s57, 1
        %s957 = scalar_select %p956, %s57, 1
        %s958 = smul.addr %s957, 8
        %s959 = scalar_lea.vmem %s0, %s958
        %p960 = pneg %p86
        %p961 = pneg %p83
        %p962 = scmp.lt.s32.totalorder %s57, 1
        %s963 = scalar_select %p962, %s57, 1
        %s964 = scalar_lea.vmem %s1, %s963
        %p965 = pneg %p112
        %p966 = pneg %p109
        %p967 = scmp.lt.s32.totalorder %s58, 2
        %s968 = scalar_select %p967, %s58, 2
        %s969 = scalar_lea.vmem %s2, %s968
        %p970 = pneg %p138
        %p971 = pneg %p135
        %p972 = scmp.lt.s32.totalorder %s58, 2
        %s973 = scalar_select %p972, %s58, 2
        %s974 = scalar_lea.vmem %s3, %s973
        %p975 = pneg %p164
        %p976 = pneg %p161
        %s977 = sand.u32 %s177, 1
        %s978 = scalar_lea.sflag [#allocation3], %s977
        %s979 = sand.u32 %s177, 1
        %s980 = smul.addr %s979, 64
        %s981 = scalar_lea.vmem [#allocation2], %s980
        %p982 = pneg %p190
        %p983 = pneg %p187
        %s984 = sand.u32 %s53, 1
        %s985 = scalar_lea.sflag [#allocation6], %s984
        %s986 = sand.u32 %s203, 1
        %s987 = smul.addr %s986, 64
        %s988 = scalar_lea.vmem [#allocation5], %s987
        %p989 = pneg %p216
        %p990 = pneg %p213
        %s991 = sand.u32 %s53, 1
        %s992 = scalar_lea.sflag [#allocation6], %s991
        %s993 = sand.u32 %s229, 1
        %s994 = smul.addr %s993, 64
        %s995 = scalar_lea.vmem [#allocation7], %s994
        %p996 = pneg %p242
        %p997 = pneg %p239
        %p998 = scmp.lt.s32.totalorder %s58, 2
        %s999 = scalar_select %p998, %s58, 2
        %s1000 = scalar_lea.vmem %s7, %s999
        %p1001 = pneg %p268
        %p1002 = pneg %p265
        %p1003 = scmp.lt.s32.totalorder %s58, 2
        %s1004 = scalar_select %p1003, %s58, 2
        %s1005 = scalar_lea.vmem %s8, %s1004
        %p1006 = pneg %p294
        %p1007 = pneg %p291
        %p1008 = scmp.lt.s32.totalorder %s58, 2
        %s1009 = scalar_select %p1008, %s58, 2
        %s1010 = scalar_lea.vmem %s9, %s1009
        %p1011 = pneg %p320
        %p1012 = pneg %p317
        %s1013 = sand.u32 %s53, 1
        %s1014 = scalar_lea.sflag [#allocation9], %s1013
        %s1015 = sand.u32 %s333, 1
        %s1016 = smul.addr %s1015, 64
        %s1017 = scalar_lea.vmem [#allocation8], %s1016
        %p1018 = pneg %p346
        %p1019 = pneg %p343
        %p1020 = scmp.lt.s32.totalorder %s58, 2
        %s1021 = scalar_select %p1020, %s58, 2
        %s1022 = scalar_lea.vmem %s11, %s1021
        %p1023 = pneg %p372
        %p1024 = pneg %p369
        %p1025 = pneg %p393
        %p1026 = pneg %p390
        %p1027 = pneg %p414
        %p1028 = pneg %p411
        %p1029 = scmp.lt.s32.totalorder %s58, 2
        %s1030 = scalar_select %p1029, %s58, 2
        %s1031 = scalar_lea.vmem %s14, %s1030
        %p1032 = pneg %p440
        %p1033 = pneg %p437
        %p1034 = scmp.lt.s32.totalorder %s58, 2
        %s1035 = scalar_select %p1034, %s58, 2
        %s1036 = scalar_lea.vmem %s15, %s1035
        %p1037 = pneg %p466
        %p1038 = pneg %p463
        %s1039 = sand.u32 %s53, 1
        %s1040 = scalar_lea.sflag [#allocation9], %s1039
        %s1041 = sand.u32 %s479, 1
        %s1042 = smul.addr %s1041, 256
        %s1043 = scalar_lea.vmem [#allocation10], %s1042
        %p1044 = pneg %p492
        %p1045 = pneg %p489
        %p1046 = scmp.lt.s32.totalorder %s58, 2
        %s1047 = scalar_select %p1046, %s58, 2
        %s1048 = smul.addr %s1047, 4
        %s1049 = scalar_lea.vmem %s17, %s1048
        %p1050 = pneg %p518
        %p1051 = pneg %p515
        %s1052 = sand.u32 %s531, 1
        %s1053 = scalar_lea.sflag [#allocation12], %s1052
        %s1054 = sand.u32 %s531, 1
        %s1055 = smul.addr %s1054, 256
        %s1056 = scalar_lea.vmem [#allocation11], %s1055
        %p1057 = pneg %p544
        %p1058 = pneg %p541
        %p1059 = scmp.lt.s32.totalorder %s58, 2
        %s1060 = scalar_select %p1059, %s58, 2
        %s1061 = scalar_lea.vmem %s19, %s1060
        %p1062 = pneg %p570
        %p1063 = pneg %p567
        %p1064 = pneg %p591
        %p1065 = pneg %p588
        %p1066 = pneg %p612
        %p1067 = pneg %p609
        %p1068 = pneg %p638
        %p1069 = pneg %p635
        %s1070 = sand.u32 %s625, 1
        %s1071 = scalar_lea.sflag [#allocation4], %s1070
        %s1072 = sand.u32 %s625, 1
        %s1073 = smul.addr %s1072, 8
        %s1074 = scalar_lea.vmem [#allocation13], %s1073
        %p1075 = pneg %p664
        %p1076 = pneg %p661
        %s1077 = sand.u32 %s651, 1
        %s1078 = scalar_lea.sflag [#allocation15], %s1077
        %s1079 = sand.u32 %s651, 1
        %s1080 = scalar_lea.vmem [#allocation14], %s1079
        %p1081 = scmp.lt.s32.totalorder %s57, 1
        %s1082 = scalar_select %p1081, %s57, 1
        %s1083 = smul.addr %s1082, 8
        %s1084 = scalar_lea.vmem %s0, %s1083
        %p1085 = scmp.lt.s32.totalorder %s57, 1
        %s1086 = scalar_select %p1085, %s57, 1
        %s1087 = scalar_lea.vmem %s1, %s1086
        %p1088 = scmp.lt.s32.totalorder %s58, 2
        %s1089 = scalar_select %p1088, %s58, 2
        %s1090 = scalar_lea.vmem %s2, %s1089
        %p1091 = scmp.lt.s32.totalorder %s58, 2
        %s1092 = scalar_select %p1091, %s58, 2
        %s1093 = scalar_lea.vmem %s3, %s1092
        %p1094 = scmp.lt.s32.totalorder %s58, 2
        %s1095 = scalar_select %p1094, %s58, 2
        %s1096 = scalar_lea.vmem %s7, %s1095
        %p1097 = scmp.lt.s32.totalorder %s58, 2
        %s1098 = scalar_select %p1097, %s58, 2
        %s1099 = scalar_lea.vmem %s8, %s1098
        %p1100 = scmp.lt.s32.totalorder %s58, 2
        %s1101 = scalar_select %p1100, %s58, 2
        %s1102 = scalar_lea.vmem %s9, %s1101
        %p1103 = scmp.lt.s32.totalorder %s58, 2
        %s1104 = scalar_select %p1103, %s58, 2
        %s1105 = scalar_lea.vmem %s11, %s1104
        %p1106 = scmp.lt.s32.totalorder %s58, 2
        %s1107 = scalar_select %p1106, %s58, 2
        %s1108 = scalar_lea.vmem %s14, %s1107
        %p1109 = scmp.lt.s32.totalorder %s58, 2
        %s1110 = scalar_select %p1109, %s58, 2
        %s1111 = scalar_lea.vmem %s15, %s1110
        %p1112 = scmp.lt.s32.totalorder %s58, 2
        %s1113 = scalar_select %p1112, %s58, 2
        %s1114 = smul.addr %s1113, 4
        %s1115 = scalar_lea.vmem %s17, %s1114
        %p1116 = scmp.lt.s32.totalorder %s58, 2
        %s1117 = scalar_select %p1116, %s58, 2
        %s1118 = scalar_lea.vmem %s19, %s1117
        %p1120 = scmp.eq.s32.totalorder %s58, 0
        // Predicated region
        $region133: #{tpu_custom_call.1} parent=107 // pred_check
          %p1121 = pneg %p1120
        $region134: #{tpu_custom_call.1} parent=107 // pred_check_branch
          %1123 = sbr.rel (%p1121) target = $region136
        $region135: #{tpu_custom_call.1} parent=107 // pred_region
          %v1124 = vld [vmem:[%s1084] sm:$0xff]
          %1125 = vst [vmem:[%s1074] sm:$0xff] %v1124
          %v1126 = vld [vmem:[%s1087] sm:$0x1]
          %1127 = vst [vmem:[%s1080] sm:$0x1] %v1126
        $region136: #{tpu_custom_call.1} parent=107 // pred_fallthru
          _
        %v1128 = vld [vmem:[%s1074] sm:$0xff]
        %v1129 = vld [vmem:[%s1080] sm:$0x1]
        %v1130 = vld [vmem:[%s1090] sm:$0x1]
        %v1131 = vld [vmem:[%s1093] sm:$0x1]
        %1132 = vadd.xlane.f32.xlu0 %v1128
        %v1133 = vpop.xlane.xlu0 %1132
        %v1134 = vrcp.pop 128.0
        %v1135 = vmul.f32 %v1133, %v1134
        %v1136 = vsub.f32 %v1128, %v1135
        %v1137 = vmul.f32 %v1136, %v1136
        %1138 = vadd.xlane.f32.xlu0 %v1137
        %v1139 = vpop.xlane.xlu0 %1138
        %v1140 = vmul.f32 %v1139, %v1134
        %v1141 = vadd.f32 %v1140, 1e-06
        %v1142 = vrsqrt.pop %v1141
        %v1143 = vmul.f32 %v1136, %v1142
        %v1145 = vlaneseq
        %v1146 = vshrl.u32 %v1145, 7
        %v1147 = vsub.s32 0, %v1146
        %v1148 = vrot.slane %v1130, %v1147
        %v1150 = vmul.f32 %v1143, %v1148
        %v1152 = vlaneseq
        %v1153 = vshrl.u32 %v1152, 7
        %v1154 = vsub.s32 0, %v1153
        %v1155 = vrot.slane %v1131, %v1154
        %v1157 = vadd.f32 %v1150, %v1155
        %vm1158 = vcmask 1040384
        %v1159 = vsel %vm1158, %v1129, 0.0
        %1160 = vadd.xlane.f32.xlu0 %v1159
        %v1161 = vpop.xlane.xlu0 %1160
        %v1162 = vmul.f32 %v1161, %v1134
        %v1163 = vsub.f32 %v1129, %v1162
        %v1164 = vmul.f32 %v1163, %v1163
        %v1165 = vsel %vm1158, %v1164, 0.0
        %1166 = vadd.xlane.f32.xlu0 %v1165
        %v1167 = vpop.xlane.xlu0 %1166
        %v1168 = vmul.f32 %v1167, %v1134
        %v1169 = vadd.f32 %v1168, 1e-06
        %v1170 = vrsqrt.pop %v1169
        %v1171 = vmul.f32 %v1163, %v1170
        %v1172 = vmul.f32 %v1171, %v1130
        %v1173 = vadd.f32 %v1172, %v1131
        %v1174 = vpack.c.bf16 %v1157, %v1157
        %v1175 = vpack.c.bf16 %v1173, %v1173
        %v1176 = vld [vmem:[%s906] sm:$0xf]
        %v1177 = vld [vmem:[%s906 + $0x4] sm:$0xf]
        %v1178 = vld [vmem:[%s906 + $0x8] sm:$0xf]
        %v1179 = vld [vmem:[%s906 + $0xc] sm:$0xf]
        %v1180 = vld [vmem:[%s906 + $0x10] sm:$0xf]
        %v1181 = vld [vmem:[%s906 + $0x14] sm:$0xf]
        %v1182 = vld [vmem:[%s906 + $0x18] sm:$0xf]
        %v1183 = vld [vmem:[%s906 + $0x1c] sm:$0xf]
        %v1184 = vld [vmem:[%s906 + $0x20] sm:$0xf]
        %v1185 = vld [vmem:[%s906 + $0x24] sm:$0xf]
        %v1186 = vld [vmem:[%s906 + $0x28] sm:$0xf]
        %v1187 = vld [vmem:[%s906 + $0x2c] sm:$0xf]
        %v1188 = vld [vmem:[%s906 + $0x30] sm:$0xf]
        %v1189 = vld [vmem:[%s906 + $0x34] sm:$0xf]
        %v1190 = vld [vmem:[%s906 + $0x38] sm:$0xf]
        %v1191 = vld [vmem:[%s906 + $0x3c] sm:$0xf]
        %v1192 = vld [vmem:[%s1096] sm:$0x1]
        %v1209 = vunpack.c.l.b16 %v1176
        %v1210 = vunpack.c.l.b16 %v1177
        %v1211 = vunpack.c.l.b16 %v1178
        %v1212 = vunpack.c.l.b16 %v1179
        %v1213 = vunpack.c.l.b16 %v1180
        %v1214 = vunpack.c.l.b16 %v1181
        %v1215 = vunpack.c.l.b16 %v1182
        %v1216 = vunpack.c.l.b16 %v1183
        %v1217 = vunpack.c.l.b16 %v1184
        %v1218 = vunpack.c.l.b16 %v1185
        %v1219 = vunpack.c.l.b16 %v1186
        %v1220 = vunpack.c.l.b16 %v1187
        %v1221 = vunpack.c.l.b16 %v1188
        %v1222 = vunpack.c.l.b16 %v1189
        %v1223 = vunpack.c.l.b16 %v1190
        %v1224 = vunpack.c.l.b16 %v1191
        %v1225 = vpack.c.b16 %v1210, %v1209
        %v1226 = vpack.c.b16 %v1212, %v1211
        %v1227 = vpack.c.b16 %v1214, %v1213
        %v1228 = vpack.c.b16 %v1216, %v1215
        %v1229 = vpack.c.b16 %v1218, %v1217
        %v1230 = vpack.c.b16 %v1220, %v1219
        %v1231 = vpack.c.b16 %v1222, %v1221
        %v1232 = vpack.c.b16 %v1224, %v1223
        %1241 = vmatprep.subr.bf16.mxu0 0
        %1242 = vmatpush1.bf16.msra.mxu0 %v1225
        %1243 = vmatprep.subr.bf16.mxu0 0
        %1244 = vmatpush1.bf16.msra.mxu0 %v1226
        %1245 = vmatprep.subr.bf16.mxu0 0
        %1246 = vmatpush1.bf16.msra.mxu0 %v1227
        %1247 = vmatprep.subr.bf16.mxu0 0
        %1248 = vmatpush1.bf16.msra.mxu0 %v1228
        %1249 = vmatprep.subr.bf16.mxu0 0
        %1250 = vmatpush1.bf16.msra.mxu0 %v1229
        %1251 = vmatprep.subr.bf16.mxu0 0
        %1252 = vmatpush1.bf16.msra.mxu0 %v1230
        %1253 = vmatprep.subr.bf16.mxu0 0
        %1254 = vmatpush1.bf16.msra.mxu0 %v1231
        %1255 = vmatprep.subr.bf16.mxu0 0
        %1256 = vmatpush1.bf16.msra.mxu0 %v1232
        %1257 = vmatprep.subr.bf16.mxu0 0
        %1258 = vmatpush1.bf16.msra.mxu0 0
        %1259 = vmatprep.subr.bf16.mxu0 0
        %1260 = vmatpush1.bf16.msra.mxu0 0
        %1261 = vmatprep.subr.bf16.mxu0 0
        %1262 = vmatpush1.bf16.msra.mxu0 0
        %1263 = vmatprep.subr.bf16.mxu0 0
        %1264 = vmatpush1.bf16.msra.mxu0 0
        %1265 = vmatprep.subr.bf16.mxu0 0
        %1266 = vmatpush1.bf16.msra.mxu0 0
        %1267 = vmatprep.subr.bf16.mxu0 0
        %1268 = vmatpush1.bf16.msra.mxu0 0
        %1269 = vmatprep.subr.bf16.mxu0 0
        %1270 = vmatpush1.bf16.msra.mxu0 0
        %1271 = vmatprep.subr.bf16.mxu0 0
        %1272 = vmatpush1.bf16.msra.mxu0 0
        %1273 = vmatprep.mubr.bf16.mxu0 0
        %1274 = vmatmul.mubr.bf16.gmra.mrb[0].mxu0 %v1175
        %v1275 = vpop.f32.mrb[0].mxu0
        %v1276 = vadd.f32 %v1192, %v1275
        %v1277 = vpop.f32.mrb[0].mxu0
        %v1278 = vpop.f32.mrb[0].mxu0
        %v1279 = vpop.f32.mrb[0].mxu0
        %1280 = vdwg.mxu0
        %v1281 = vld [vmem:[%s915] sm:$0xf]
        %v1282 = vld [vmem:[%s915 + $0x4] sm:$0xf]
        %v1283 = vld [vmem:[%s915 + $0x8] sm:$0xf]
        %v1284 = vld [vmem:[%s915 + $0xc] sm:$0xf]
        %v1285 = vld [vmem:[%s915 + $0x10] sm:$0xf]
        %v1286 = vld [vmem:[%s915 + $0x14] sm:$0xf]
        %v1287 = vld [vmem:[%s915 + $0x18] sm:$0xf]
        %v1288 = vld [vmem:[%s915 + $0x1c] sm:$0xf]
        %v1289 = vld [vmem:[%s915 + $0x20] sm:$0xf]
        %v1290 = vld [vmem:[%s915 + $0x24] sm:$0xf]
        %v1291 = vld [vmem:[%s915 + $0x28] sm:$0xf]
        %v1292 = vld [vmem:[%s915 + $0x2c] sm:$0xf]
        %v1293 = vld [vmem:[%s915 + $0x30] sm:$0xf]
        %v1294 = vld [vmem:[%s915 + $0x34] sm:$0xf]
        %v1295 = vld [vmem:[%s915 + $0x38] sm:$0xf]
        %v1296 = vld [vmem:[%s915 + $0x3c] sm:$0xf]
        %v1297 = vld [vmem:[%s1099] sm:$0x1]
        %v1299 = vlaneseq
        %v1300 = vshrl.u32 %v1299, 7
        %v1301 = vsub.s32 0, %v1300
        %v1302 = vrot.slane %v1297, %v1301
        %v1320 = vunpack.c.l.b16 %v1281
        %v1321 = vunpack.c.l.b16 %v1282
        %v1322 = vunpack.c.l.b16 %v1283
        %v1323 = vunpack.c.l.b16 %v1284
        %v1324 = vunpack.c.l.b16 %v1285
        %v1325 = vunpack.c.l.b16 %v1286
        %v1326 = vunpack.c.l.b16 %v1287
        %v1327 = vunpack.c.l.b16 %v1288
        %v1328 = vunpack.c.l.b16 %v1289
        %v1329 = vunpack.c.l.b16 %v1290
        %v1330 = vunpack.c.l.b16 %v1291
        %v1331 = vunpack.c.l.b16 %v1292
        %v1332 = vunpack.c.l.b16 %v1293
        %v1333 = vunpack.c.l.b16 %v1294
        %v1334 = vunpack.c.l.b16 %v1295
        %v1335 = vunpack.c.l.b16 %v1296
        %v1336 = vpack.c.b16 %v1321, %v1320
        %v1337 = vpack.c.b16 %v1323, %v1322
        %v1338 = vpack.c.b16 %v1325, %v1324
        %v1339 = vpack.c.b16 %v1327, %v1326
        %v1340 = vpack.c.b16 %v1329, %v1328
        %v1341 = vpack.c.b16 %v1331, %v1330
        %v1342 = vpack.c.b16 %v1333, %v1332
        %v1343 = vpack.c.b16 %v1335, %v1334
        %1352 = vmatprep.subr.bf16.mxu0 0
        %1353 = vmatpush1.bf16.msra.mxu0 %v1336
        %1354 = vmatprep.subr.bf16.mxu0 0
        %1355 = vmatpush1.bf16.msra.mxu0 %v1337
        %1356 = vmatprep.subr.bf16.mxu0 0
        %1357 = vmatpush1.bf16.msra.mxu0 %v1338
        %1358 = vmatprep.subr.bf16.mxu0 0
        %1359 = vmatpush1.bf16.msra.mxu0 %v1339
        %1360 = vmatprep.subr.bf16.mxu0 0
        %1361 = vmatpush1.bf16.msra.mxu0 %v1340
        %1362 = vmatprep.subr.bf16.mxu0 0
        %1363 = vmatpush1.bf16.msra.mxu0 %v1341
        %1364 = vmatprep.subr.bf16.mxu0 0
        %1365 = vmatpush1.bf16.msra.mxu0 %v1342
        %1366 = vmatprep.subr.bf16.mxu0 0
        %1367 = vmatpush1.bf16.msra.mxu0 %v1343
        %1368 = vmatprep.subr.bf16.mxu0 0
        %1369 = vmatpush1.bf16.msra.mxu0 0
        %1370 = vmatprep.subr.bf16.mxu0 0
        %1371 = vmatpush1.bf16.msra.mxu0 0
        %1372 = vmatprep.subr.bf16.mxu0 0
        %1373 = vmatpush1.bf16.msra.mxu0 0
        %1374 = vmatprep.subr.bf16.mxu0 0
        %1375 = vmatpush1.bf16.msra.mxu0 0
        %1376 = vmatprep.subr.bf16.mxu0 0
        %1377 = vmatpush1.bf16.msra.mxu0 0
        %1378 = vmatprep.subr.bf16.mxu0 0
        %1379 = vmatpush1.bf16.msra.mxu0 0
        %1380 = vmatprep.subr.bf16.mxu0 0
        %1381 = vmatpush1.bf16.msra.mxu0 0
        %1382 = vmatprep.subr.bf16.mxu0 0
        %1383 = vmatpush1.bf16.msra.mxu0 0
        %1384 = vmatprep.mubr.bf16.mxu0 0
        %1385 = vmatmul.mubr.bf16.gmra.mrb[0].mxu0 %v1174
        %v1386 = vpop.f32.mrb[0].mxu0
        %v1387 = vadd.f32 %v1302, %v1386
        %v1388 = vpop.f32.mrb[0].mxu0
        %v1389 = vpop.f32.mrb[0].mxu0
        %v1390 = vpop.f32.mrb[0].mxu0
        %1391 = vdwg.mxu0
        %v1392 = vld [vmem:[%s924] sm:$0xf]
        %v1393 = vld [vmem:[%s924 + $0x4] sm:$0xf]
        %v1394 = vld [vmem:[%s924 + $0x8] sm:$0xf]
        %v1395 = vld [vmem:[%s924 + $0xc] sm:$0xf]
        %v1396 = vld [vmem:[%s924 + $0x10] sm:$0xf]
        %v1397 = vld [vmem:[%s924 + $0x14] sm:$0xf]
        %v1398 = vld [vmem:[%s924 + $0x18] sm:$0xf]
        %v1399 = vld [vmem:[%s924 + $0x1c] sm:$0xf]
        %v1400 = vld [vmem:[%s924 + $0x20] sm:$0xf]
        %v1401 = vld [vmem:[%s924 + $0x24] sm:$0xf]
        %v1402 = vld [vmem:[%s924 + $0x28] sm:$0xf]
        %v1403 = vld [vmem:[%s924 + $0x2c] sm:$0xf]
        %v1404 = vld [vmem:[%s924 + $0x30] sm:$0xf]
        %v1405 = vld [vmem:[%s924 + $0x34] sm:$0xf]
        %v1406 = vld [vmem:[%s924 + $0x38] sm:$0xf]
        %v1407 = vld [vmem:[%s924 + $0x3c] sm:$0xf]
        %v1408 = vld [vmem:[%s1102] sm:$0x1]
        %v1410 = vlaneseq
        %v1411 = vshrl.u32 %v1410, 7
        %v1412 = vsub.s32 0, %v1411
        %v1413 = vrot.slane %v1408, %v1412
        %v1431 = vunpack.c.l.b16 %v1392
        %v1432 = vunpack.c.l.b16 %v1393
        %v1433 = vunpack.c.l.b16 %v1394
        %v1434 = vunpack.c.l.b16 %v1395
        %v1435 = vunpack.c.l.b16 %v1396
        %v1436 = vunpack.c.l.b16 %v1397
        %v1437 = vunpack.c.l.b16 %v1398
        %v1438 = vunpack.c.l.b16 %v1399
        %v1439 = vunpack.c.l.b16 %v1400
        %v1440 = vunpack.c.l.b16 %v1401
        %v1441 = vunpack.c.l.b16 %v1402
        %v1442 = vunpack.c.l.b16 %v1403
        %v1443 = vunpack.c.l.b16 %v1404
        %v1444 = vunpack.c.l.b16 %v1405
        %v1445 = vunpack.c.l.b16 %v1406
        %v1446 = vunpack.c.l.b16 %v1407
        %v1447 = vpack.c.b16 %v1432, %v1431
        %v1448 = vpack.c.b16 %v1434, %v1433
        %v1449 = vpack.c.b16 %v1436, %v1435
        %v1450 = vpack.c.b16 %v1438, %v1437
        %v1451 = vpack.c.b16 %v1440, %v1439
        %v1452 = vpack.c.b16 %v1442, %v1441
        %v1453 = vpack.c.b16 %v1444, %v1443
        %v1454 = vpack.c.b16 %v1446, %v1445
        %1463 = vmatprep.subr.bf16.mxu0 0
        %1464 = vmatpush1.bf16.msra.mxu0 %v1447
        %1465 = vmatprep.subr.bf16.mxu0 0
        %1466 = vmatpush1.bf16.msra.mxu0 %v1448
        %1467 = vmatprep.subr.bf16.mxu0 0
        %1468 = vmatpush1.bf16.msra.mxu0 %v1449
        %1469 = vmatprep.subr.bf16.mxu0 0
        %1470 = vmatpush1.bf16.msra.mxu0 %v1450
        %1471 = vmatprep.subr.bf16.mxu0 0
        %1472 = vmatpush1.bf16.msra.mxu0 %v1451
        %1473 = vmatprep.subr.bf16.mxu0 0
        %1474 = vmatpush1.bf16.msra.mxu0 %v1452
        %1475 = vmatprep.subr.bf16.mxu0 0
        %1476 = vmatpush1.bf16.msra.mxu0 %v1453
        %1477 = vmatprep.subr.bf16.mxu0 0
        %1478 = vmatpush1.bf16.msra.mxu0 %v1454
        %1479 = vmatprep.subr.bf16.mxu0 0
        %1480 = vmatpush1.bf16.msra.mxu0 0
        %1481 = vmatprep.subr.bf16.mxu0 0
        %1482 = vmatpush1.bf16.msra.mxu0 0
        %1483 = vmatprep.subr.bf16.mxu0 0
        %1484 = vmatpush1.bf16.msra.mxu0 0
        %1485 = vmatprep.subr.bf16.mxu0 0
        %1486 = vmatpush1.bf16.msra.mxu0 0
        %1487 = vmatprep.subr.bf16.mxu0 0
        %1488 = vmatpush1.bf16.msra.mxu0 0
        %1489 = vmatprep.subr.bf16.mxu0 0
        %1490 = vmatpush1.bf16.msra.mxu0 0
        %1491 = vmatprep.subr.bf16.mxu0 0
        %1492 = vmatpush1.bf16.msra.mxu0 0
        %1493 = vmatprep.subr.bf16.mxu0 0
        %1494 = vmatpush1.bf16.msra.mxu0 0
        %1495 = vmatprep.mubr.bf16.mxu0 0
        %1496 = vmatmul.mubr.bf16.gmra.mrb[0].mxu0 %v1174
        %v1497 = vpop.f32.mrb[0].mxu0
        %v1498 = vadd.f32 %v1413, %v1497
        %v1499 = vpop.f32.mrb[0].mxu0
        %v1500 = vpop.f32.mrb[0].mxu0
        %v1501 = vpop.f32.mrb[0].mxu0
        %1502 = vdwg.mxu0
        %v1503 = vmul.f32 %v1276, 0.17677669
        %v1504 = vlaneseq
        %v1505 = vshrl.u32 %v1504, 7
        %v1506 = vsub.s32 0, %v1505
        %v1507 = vrot.slane %v1503, %v1506
        %v1508 = vmul.f32 %v1387, %v1507
        %v1509 = vld [vmem:[%s12] sm:$0xff]
        %v1510 = vld [vmem:[%s12 + $0x8] sm:$0xff]
        %v1511 = vld [vmem:[%s12 + $0x10] sm:$0xff]
        %v1512 = vld [vmem:[%s12 + $0x18] sm:$0xff]
        %v1513 = vld [vmem:[%s12 + $0x20] sm:$0xff]
        %v1514 = vld [vmem:[%s12 + $0x28] sm:$0xff]
        %v1515 = vld [vmem:[%s12 + $0x30] sm:$0xff]
        %v1516 = vld [vmem:[%s12 + $0x38] sm:$0xff]
        %v1517 = vld [vmem:[%s12 + $0x40] sm:$0xff]
        %v1518 = vld [vmem:[%s12 + $0x48] sm:$0xff]
        %v1519 = vld [vmem:[%s12 + $0x50] sm:$0xff]
        %v1520 = vld [vmem:[%s12 + $0x58] sm:$0xff]
        %v1521 = vld [vmem:[%s12 + $0x60] sm:$0xff]
        %v1522 = vld [vmem:[%s12 + $0x68] sm:$0xff]
        %v1523 = vld [vmem:[%s12 + $0x70] sm:$0xff]
        %v1524 = vld [vmem:[%s12 + $0x78] sm:$0xff]
        %1525 = vmatprep.subr.mxu0 0.0
        %1526 = vmatpush1.msra.mxu0 %v1509
        %1527 = vmatprep.subr.mxu0 0.0
        %1528 = vmatpush1.msra.mxu0 %v1510
        %1529 = vmatprep.subr.mxu0 0.0
        %1530 = vmatpush1.msra.mxu0 %v1511
        %1531 = vmatprep.subr.mxu0 0.0
        %1532 = vmatpush1.msra.mxu0 %v1512
        %1533 = vmatprep.subr.mxu0 0.0
        %1534 = vmatpush1.msra.mxu0 %v1513
        %1535 = vmatprep.subr.mxu0 0.0
        %1536 = vmatpush1.msra.mxu0 %v1514
        %1537 = vmatprep.subr.mxu0 0.0
        %1538 = vmatpush1.msra.mxu0 %v1515
        %1539 = vmatprep.subr.mxu0 0.0
        %1540 = vmatpush1.msra.mxu0 %v1516
        %1541 = vmatprep.subr.mxu0 0.0
        %1542 = vmatpush1.msra.mxu0 %v1517
        %1543 = vmatprep.subr.mxu0 0.0
        %1544 = vmatpush1.msra.mxu0 %v1518
        %1545 = vmatprep.subr.mxu0 0.0
        %1546 = vmatpush1.msra.mxu0 %v1519
        %1547 = vmatprep.subr.mxu0 0.0
        %1548 = vmatpush1.msra.mxu0 %v1520
        %1549 = vmatprep.subr.mxu0 0.0
        %1550 = vmatpush1.msra.mxu0 %v1521
        %1551 = vmatprep.subr.mxu0 0.0
        %1552 = vmatpush1.msra.mxu0 %v1522
        %1553 = vmatprep.subr.mxu0 0.0
        %1554 = vmatpush1.msra.mxu0 %v1523
        %1555 = vmatprep.subr.mxu0 0.0
        %1556 = vmatpush1.msra.mxu0 %v1524
        %1557 = vmatprep.subr.mxu0 0.0
        %1558 = vmatpush1.msra.mxu0 0.0
        %1559 = vmatprep.subr.mxu0 0.0
        %1560 = vmatpush1.msra.mxu0 0.0
        %1561 = vmatprep.subr.mxu0 0.0
        %1562 = vmatpush1.msra.mxu0 0.0
        %1563 = vmatprep.subr.mxu0 0.0
        %1564 = vmatpush1.msra.mxu0 0.0
        %1565 = vmatprep.subr.mxu0 0.0
        %1566 = vmatpush1.msra.mxu0 0.0
        %1567 = vmatprep.subr.mxu0 0.0
        %1568 = vmatpush1.msra.mxu0 0.0
        %1569 = vmatprep.subr.mxu0 0.0
        %1570 = vmatpush1.msra.mxu0 0.0
        %1571 = vmatprep.subr.mxu0 0.0
        %1572 = vmatpush1.msra.mxu0 0.0
        %1573 = vmatprep.subr.mxu0 0.0
        %1574 = vmatpush1.msra.mxu0 0.0
        %1575 = vmatprep.subr.mxu0 0.0
        %1576 = vmatpush1.msra.mxu0 0.0
        %1577 = vmatprep.subr.mxu0 0.0
        %1578 = vmatpush1.msra.mxu0 0.0
        %1579 = vmatprep.subr.mxu0 0.0
        %1580 = vmatpush1.msra.mxu0 0.0
        %1581 = vmatprep.subr.mxu0 0.0
        %1582 = vmatpush1.msra.mxu0 0.0
        %1583 = vmatprep.subr.mxu0 0.0
        %1584 = vmatpush1.msra.mxu0 0.0
        %1585 = vmatprep.subr.mxu0 0.0
        %1586 = vmatpush1.msra.mxu0 0.0
        %1587 = vmatprep.subr.mxu0 0.0
        %1588 = vmatpush1.msra.mxu0 0.0
        %1589 = vmatprep.mubr.f32.mxu0 0.0
        %1590 = vmatmul.mubr.f32.gmra.mrb[0].mxu0 %v1508
        %v1591 = vpop.f32.mrb[0].mxu0
        %v1592 = vadd.f32 0.0, %v1591
        %v1593 = vpop.f32.mrb[0].mxu0
        %1594 = vdwg.mxu0
        %vm1595 = vcmask 31744
        %v1596 = vsel %vm1595, %v1592, -inf
        %v1597 = vrot.slane %v1596, 4
        %v1598 = vmax.f32 %v1596, %v1597
        %v1599 = vrot.slane %v1598, 2
        %v1600 = vmax.f32 %v1598, %v1599
        %v1601 = vrot.slane %v1600, 1
        %v1602 = vmax.f32 %v1600, %v1601
        %v1603 = vsub.f32 %v1592, %v1602
        %v1604 = vmul.f32 %v1603, 1.442695
        %v1605 = vpow.pop %v1604
        %v1606 = vsel %vm1595, %v1605, 0.0
        %v1607 = vrot.slane %v1606, 4
        %v1608 = vadd.f32 %v1606, %v1607
        %v1609 = vrot.slane %v1608, 2
        %v1610 = vadd.f32 %v1608, %v1609
        %v1611 = vrot.slane %v1610, 1
        %v1612 = vadd.f32 %v1610, %v1611
        %v1613 = vrcp.pop %v1612
        %v1614 = vmul.f32 %v1605, %v1613
        %v1615 = vld [vmem:[%s13] sm:$0xf]
        %v1617 = vsel %vm1595, %v1614, 0
        %vm1619 = vcmask 1043456
        %v1621 = vsel %vm1619, %v1615, 0
        %1623 = vmatprep.subr.mxu0 0.0
        %1624 = vmatpush1.msra.mxu0 %v1621
        %1625 = vmatprep.subr.mxu0 0.0
        %1626 = vmatpush1.msra.mxu0 0.0
        %1627 = vmatprep.subr.mxu0 0.0
        %1628 = vmatpush1.msra.mxu0 0.0
        %1629 = vmatprep.subr.mxu0 0.0
        %1630 = vmatpush1.msra.mxu0 0.0
        %1631 = vmatprep.subr.mxu0 0.0
        %1632 = vmatpush1.msra.mxu0 0.0
        %1633 = vmatprep.subr.mxu0 0.0
        %1634 = vmatpush1.msra.mxu0 0.0
        %1635 = vmatprep.subr.mxu0 0.0
        %1636 = vmatpush1.msra.mxu0 0.0
        %1637 = vmatprep.subr.mxu0 0.0
        %1638 = vmatpush1.msra.mxu0 0.0
        %1639 = vmatprep.subr.mxu0 0.0
        %1640 = vmatpush1.msra.mxu0 0.0
        %1641 = vmatprep.subr.mxu0 0.0
        %1642 = vmatpush1.msra.mxu0 0.0
        %1643 = vmatprep.subr.mxu0 0.0
        %1644 = vmatpush1.msra.mxu0 0.0
        %1645 = vmatprep.subr.mxu0 0.0
        %1646 = vmatpush1.msra.mxu0 0.0
        %1647 = vmatprep.subr.mxu0 0.0
        %1648 = vmatpush1.msra.mxu0 0.0
        %1649 = vmatprep.subr.mxu0 0.0
        %1650 = vmatpush1.msra.mxu0 0.0
        %1651 = vmatprep.subr.mxu0 0.0
        %1652 = vmatpush1.msra.mxu0 0.0
        %1653 = vmatprep.subr.mxu0 0.0
        %1654 = vmatpush1.msra.mxu0 0.0
        %1655 = vmatprep.subr.mxu0 0.0
        %1656 = vmatpush1.msra.mxu0 0.0
        %1657 = vmatprep.subr.mxu0 0.0
        %1658 = vmatpush1.msra.mxu0 0.0
        %1659 = vmatprep.subr.mxu0 0.0
        %1660 = vmatpush1.msra.mxu0 0.0
        %1661 = vmatprep.subr.mxu0 0.0
        %1662 = vmatpush1.msra.mxu0 0.0
        %1663 = vmatprep.subr.mxu0 0.0
        %1664 = vmatpush1.msra.mxu0 0.0
        %1665 = vmatprep.subr.mxu0 0.0
        %1666 = vmatpush1.msra.mxu0 0.0
        %1667 = vmatprep.subr.mxu0 0.0
        %1668 = vmatpush1.msra.mxu0 0.0
        %1669 = vmatprep.subr.mxu0 0.0
        %1670 = vmatpush1.msra.mxu0 0.0
        %1671 = vmatprep.subr.mxu0 0.0
        %1672 = vmatpush1.msra.mxu0 0.0
        %1673 = vmatprep.subr.mxu0 0.0
        %1674 = vmatpush1.msra.mxu0 0.0
        %1675 = vmatprep.subr.mxu0 0.0
        %1676 = vmatpush1.msra.mxu0 0.0
        %1677 = vmatprep.subr.mxu0 0.0
        %1678 = vmatpush1.msra.mxu0 0.0
        %1679 = vmatprep.subr.mxu0 0.0
        %1680 = vmatpush1.msra.mxu0 0.0
        %1681 = vmatprep.subr.mxu0 0.0
        %1682 = vmatpush1.msra.mxu0 0.0
        %1683 = vmatprep.subr.mxu0 0.0
        %1684 = vmatpush1.msra.mxu0 0.0
        %1685 = vmatprep.subr.mxu0 0.0
        %1686 = vmatpush1.msra.mxu0 0.0
        %1687 = vmatprep.mubr.f32.mxu0 0.0
        %1688 = vmatmul.mubr.f32.gmra.mrb[0].mxu0 %v1617
        %v1689 = vpop.f32.mrb[0].mxu0
        %v1690 = vadd.f32 0.0, %v1689
        %v1691 = vpop.f32.mrb[0].mxu0
        %1692 = vdwg.mxu0
        %v1693 = vmul.f32 %v1498, %v1690
        %v1694 = vrot.slane %v1693, 4
        %v1695 = vadd.f32 %v1693, %v1694
        %v1696 = vrot.slane %v1695, 2
        %v1697 = vadd.f32 %v1695, %v1696
        %v1698 = vrot.slane %v1697, 1
        %v1699 = vadd.f32 %v1697, %v1698
        %v1700 = vpack.c.bf16 %v1699, %v1699
        %v1701 = vld [vmem:[%s933] sm:$0xf]
        %v1702 = vld [vmem:[%s933 + $0x4] sm:$0xf]
        %v1703 = vld [vmem:[%s933 + $0x8] sm:$0xf]
        %v1704 = vld [vmem:[%s933 + $0xc] sm:$0xf]
        %v1705 = vld [vmem:[%s933 + $0x10] sm:$0xf]
        %v1706 = vld [vmem:[%s933 + $0x14] sm:$0xf]
        %v1707 = vld [vmem:[%s933 + $0x18] sm:$0xf]
        %v1708 = vld [vmem:[%s933 + $0x1c] sm:$0xf]
        %v1709 = vld [vmem:[%s933 + $0x20] sm:$0xf]
        %v1710 = vld [vmem:[%s933 + $0x24] sm:$0xf]
        %v1711 = vld [vmem:[%s933 + $0x28] sm:$0xf]
        %v1712 = vld [vmem:[%s933 + $0x2c] sm:$0xf]
        %v1713 = vld [vmem:[%s933 + $0x30] sm:$0xf]
        %v1714 = vld [vmem:[%s933 + $0x34] sm:$0xf]
        %v1715 = vld [vmem:[%s933 + $0x38] sm:$0xf]
        %v1716 = vld [vmem:[%s933 + $0x3c] sm:$0xf]
        %v1717 = vld [vmem:[%s1105] sm:$0x1]
        %v1734 = vunpack.c.l.b16 %v1701
        %v1735 = vunpack.c.l.b16 %v1702
        %v1736 = vunpack.c.l.b16 %v1703
        %v1737 = vunpack.c.l.b16 %v1704
        %v1738 = vunpack.c.l.b16 %v1705
        %v1739 = vunpack.c.l.b16 %v1706
        %v1740 = vunpack.c.l.b16 %v1707
        %v1741 = vunpack.c.l.b16 %v1708
        %v1742 = vunpack.c.l.b16 %v1709
        %v1743 = vunpack.c.l.b16 %v1710
        %v1744 = vunpack.c.l.b16 %v1711
        %v1745 = vunpack.c.l.b16 %v1712
        %v1746 = vunpack.c.l.b16 %v1713
        %v1747 = vunpack.c.l.b16 %v1714
        %v1748 = vunpack.c.l.b16 %v1715
        %v1749 = vunpack.c.l.b16 %v1716
        %v1750 = vpack.c.b16 %v1735, %v1734
        %v1751 = vpack.c.b16 %v1737, %v1736
        %v1752 = vpack.c.b16 %v1739, %v1738
        %v1753 = vpack.c.b16 %v1741, %v1740
        %v1754 = vpack.c.b16 %v1743, %v1742
        %v1755 = vpack.c.b16 %v1745, %v1744
        %v1756 = vpack.c.b16 %v1747, %v1746
        %v1757 = vpack.c.b16 %v1749, %v1748
        %1766 = vmatprep.subr.bf16.mxu0 0
        %1767 = vmatpush1.bf16.msra.mxu0 %v1750
        %1768 = vmatprep.subr.bf16.mxu0 0
        %1769 = vmatpush1.bf16.msra.mxu0 %v1751
        %1770 = vmatprep.subr.bf16.mxu0 0
        %1771 = vmatpush1.bf16.msra.mxu0 %v1752
        %1772 = vmatprep.subr.bf16.mxu0 0
        %1773 = vmatpush1.bf16.msra.mxu0 %v1753
        %1774 = vmatprep.subr.bf16.mxu0 0
        %1775 = vmatpush1.bf16.msra.mxu0 %v1754
        %1776 = vmatprep.subr.bf16.mxu0 0
        %1777 = vmatpush1.bf16.msra.mxu0 %v1755
        %1778 = vmatprep.subr.bf16.mxu0 0
        %1779 = vmatpush1.bf16.msra.mxu0 %v1756
        %1780 = vmatprep.subr.bf16.mxu0 0
        %1781 = vmatpush1.bf16.msra.mxu0 %v1757
        %1782 = vmatprep.subr.bf16.mxu0 0
        %1783 = vmatpush1.bf16.msra.mxu0 0
        %1784 = vmatprep.subr.bf16.mxu0 0
        %1785 = vmatpush1.bf16.msra.mxu0 0
        %1786 = vmatprep.subr.bf16.mxu0 0
        %1787 = vmatpush1.bf16.msra.mxu0 0
        %1788 = vmatprep.subr.bf16.mxu0 0
        %1789 = vmatpush1.bf16.msra.mxu0 0
        %1790 = vmatprep.subr.bf16.mxu0 0
        %1791 = vmatpush1.bf16.msra.mxu0 0
        %1792 = vmatprep.subr.bf16.mxu0 0
        %1793 = vmatpush1.bf16.msra.mxu0 0
        %1794 = vmatprep.subr.bf16.mxu0 0
        %1795 = vmatpush1.bf16.msra.mxu0 0
        %1796 = vmatprep.subr.bf16.mxu0 0
        %1797 = vmatpush1.bf16.msra.mxu0 0
        %1798 = vmatprep.mubr.bf16.mxu0 0
        %1799 = vmatmul.mubr.bf16.gmra.mrb[0].mxu0 %v1700
        %v1800 = vpop.f32.mrb[0].mxu0
        %v1801 = vadd.f32 %v1717, %v1800
        %v1802 = vpop.f32.mrb[0].mxu0
        %v1803 = vpop.f32.mrb[0].mxu0
        %v1804 = vpop.f32.mrb[0].mxu0
        %1805 = vdwg.mxu0
        %v1806 = vadd.f32 %v1129, %v1801
        %v1807 = vld [vmem:[%s1108] sm:$0x1]
        %v1808 = vld [vmem:[%s1111] sm:$0x1]
        %v1810 = vlaneseq
        %v1811 = vshrl.u32 %v1810, 7
        %v1812 = vsub.s32 0, %v1811
        %v1813 = vrot.slane %v1807, %v1812
        %v1815 = vmul.f32 %v1143, %v1813
        %v1817 = vlaneseq
        %v1818 = vshrl.u32 %v1817, 7
        %v1819 = vsub.s32 0, %v1818
        %v1820 = vrot.slane %v1808, %v1819
        %v1822 = vadd.f32 %v1815, %v1820
        %v1823 = vpack.c.bf16 %v1822, %v1822
        %v1824 = vld [vmem:[%s942] sm:$0xff]
        %v1825 = vld [vmem:[%s942 + $0x8] sm:$0xff]
        %v1826 = vld [vmem:[%s942 + $0x10] sm:$0xff]
        %v1827 = vld [vmem:[%s942 + $0x18] sm:$0xff]
        %v1828 = vld [vmem:[%s942 + $0x20] sm:$0xff]
        %v1829 = vld [vmem:[%s942 + $0x28] sm:$0xff]
        %v1830 = vld [vmem:[%s942 + $0x30] sm:$0xff]
        %v1831 = vld [vmem:[%s942 + $0x38] sm:$0xff]
        %v1832 = vld [vmem:[%s942 + $0x40] sm:$0xff]
        %v1833 = vld [vmem:[%s942 + $0x48] sm:$0xff]
        %v1834 = vld [vmem:[%s942 + $0x50] sm:$0xff]
        %v1835 = vld [vmem:[%s942 + $0x58] sm:$0xff]
        %v1836 = vld [vmem:[%s942 + $0x60] sm:$0xff]
        %v1837 = vld [vmem:[%s942 + $0x68] sm:$0xff]
        %v1838 = vld [vmem:[%s942 + $0x70] sm:$0xff]
        %v1839 = vld [vmem:[%s942 + $0x78] sm:$0xff]
        %v1840 = vld [vmem:[%s942 + $0x80] sm:$0xff]
        %v1841 = vld [vmem:[%s942 + $0x88] sm:$0xff]
        %v1842 = vld [vmem:[%s942 + $0x90] sm:$0xff]
        %v1843 = vld [vmem:[%s942 + $0x98] sm:$0xff]
        %v1844 = vld [vmem:[%s942 + $0xa0] sm:$0xff]
        %v1845 = vld [vmem:[%s942 + $0xa8] sm:$0xff]
        %v1846 = vld [vmem:[%s942 + $0xb0] sm:$0xff]
        %v1847 = vld [vmem:[%s942 + $0xb8] sm:$0xff]
        %v1848 = vld [vmem:[%s942 + $0xc0] sm:$0xff]
        %v1849 = vld [vmem:[%s942 + $0xc8] sm:$0xff]
        %v1850 = vld [vmem:[%s942 + $0xd0] sm:$0xff]
        %v1851 = vld [vmem:[%s942 + $0xd8] sm:$0xff]
        %v1852 = vld [vmem:[%s942 + $0xe0] sm:$0xff]
        %v1853 = vld [vmem:[%s942 + $0xe8] sm:$0xff]
        %v1854 = vld [vmem:[%s942 + $0xf0] sm:$0xff]
        %v1855 = vld [vmem:[%s942 + $0xf8] sm:$0xff]
        %v1856 = vld [vmem:[%s1115] sm:$0xf]
        %v1858 = vlaneseq
        %v1859 = vshrl.u32 %v1858, 7
        %v1860 = vsub.s32 0, %v1859
        %v1861 = vrot.slane %v1856, %v1860
        %v1862 = vlaneseq
        %v1863 = vshrl.u32 %v1862, 7
        %v1864 = vsub.s32 1, %v1863
        %v1865 = vrot.slane %v1856, %v1864
        %v1866 = vlaneseq
        %v1867 = vshrl.u32 %v1866, 7
        %v1868 = vsub.s32 2, %v1867
        %v1869 = vrot.slane %v1856, %v1868
        %v1870 = vlaneseq
        %v1871 = vshrl.u32 %v1870, 7
        %v1872 = vsub.s32 3, %v1871
        %v1873 = vrot.slane %v1856, %v1872
        %v1910 = vunpack.c.l.b16 %v1824
        %v1911 = vunpack.c.h.b16 %v1824
        %v1912 = vunpack.c.l.b16 %v1825
        %v1913 = vunpack.c.h.b16 %v1825
        %v1914 = vunpack.c.l.b16 %v1826
        %v1915 = vunpack.c.h.b16 %v1826
        %v1916 = vunpack.c.l.b16 %v1827
        %v1917 = vunpack.c.h.b16 %v1827
        %v1918 = vunpack.c.l.b16 %v1828
        %v1919 = vunpack.c.h.b16 %v1828
        %v1920 = vunpack.c.l.b16 %v1829
        %v1921 = vunpack.c.h.b16 %v1829
        %v1922 = vunpack.c.l.b16 %v1830
        %v1923 = vunpack.c.h.b16 %v1830
        %v1924 = vunpack.c.l.b16 %v1831
        %v1925 = vunpack.c.h.b16 %v1831
        %v1926 = vunpack.c.l.b16 %v1832
        %v1927 = vunpack.c.h.b16 %v1832
        %v1928 = vunpack.c.l.b16 %v1833
        %v1929 = vunpack.c.h.b16 %v1833
        %v1930 = vunpack.c.l.b16 %v1834
        %v1931 = vunpack.c.h.b16 %v1834
        %v1932 = vunpack.c.l.b16 %v1835
        %v1933 = vunpack.c.h.b16 %v1835
        %v1934 = vunpack.c.l.b16 %v1836
        %v1935 = vunpack.c.h.b16 %v1836
        %v1936 = vunpack.c.l.b16 %v1837
        %v1937 = vunpack.c.h.b16 %v1837
        %v1938 = vunpack.c.l.b16 %v1838
        %v1939 = vunpack.c.h.b16 %v1838
        %v1940 = vunpack.c.l.b16 %v1839
        %v1941 = vunpack.c.h.b16 %v1839
        %v1942 = vunpack.c.l.b16 %v1840
        %v1943 = vunpack.c.h.b16 %v1840
        %v1944 = vunpack.c.l.b16 %v1841
        %v1945 = vunpack.c.h.b16 %v1841
        %v1946 = vunpack.c.l.b16 %v1842
        %v1947 = vunpack.c.h.b16 %v1842
        %v1948 = vunpack.c.l.b16 %v1843
        %v1949 = vunpack.c.h.b16 %v1843
        %v1950 = vunpack.c.l.b16 %v1844
        %v1951 = vunpack.c.h.b16 %v1844
        %v1952 = vunpack.c.l.b16 %v1845
        %v1953 = vunpack.c.h.b16 %v1845
        %v1954 = vunpack.c.l.b16 %v1846
        %v1955 = vunpack.c.h.b16 %v1846
        %v1956 = vunpack.c.l.b16 %v1847
        %v1957 = vunpack.c.h.b16 %v1847
        %v1958 = vunpack.c.l.b16 %v1848
        %v1959 = vunpack.c.h.b16 %v1848
        %v1960 = vunpack.c.l.b16 %v1849
        %v1961 = vunpack.c.h.b16 %v1849
        %v1962 = vunpack.c.l.b16 %v1850
        %v1963 = vunpack.c.h.b16 %v1850
        %v1964 = vunpack.c.l.b16 %v1851
        %v1965 = vunpack.c.h.b16 %v1851
        %v1966 = vunpack.c.l.b16 %v1852
        %v1967 = vunpack.c.h.b16 %v1852
        %v1968 = vunpack.c.l.b16 %v1853
        %v1969 = vunpack.c.h.b16 %v1853
        %v1970 = vunpack.c.l.b16 %v1854
        %v1971 = vunpack.c.h.b16 %v1854
        %v1972 = vunpack.c.l.b16 %v1855
        %v1973 = vunpack.c.h.b16 %v1855
        %v1974 = vpack.c.b16 %v1914, %v1910
        %v1975 = vpack.c.b16 %v1915, %v1911
        %v1976 = vpack.c.b16 %v1916, %v1912
        %v1977 = vpack.c.b16 %v1917, %v1913
        %v1978 = vpack.c.b16 %v1922, %v1918
        %v1979 = vpack.c.b16 %v1923, %v1919
        %v1980 = vpack.c.b16 %v1924, %v1920
        %v1981 = vpack.c.b16 %v1925, %v1921
        %v1982 = vpack.c.b16 %v1930, %v1926
        %v1983 = vpack.c.b16 %v1931, %v1927
        %v1984 = vpack.c.b16 %v1932, %v1928
        %v1985 = vpack.c.b16 %v1933, %v1929
        %v1986 = vpack.c.b16 %v1938, %v1934
        %v1987 = vpack.c.b16 %v1939, %v1935
        %v1988 = vpack.c.b16 %v1940, %v1936
        %v1989 = vpack.c.b16 %v1941, %v1937
        %v1990 = vpack.c.b16 %v1946, %v1942
        %v1991 = vpack.c.b16 %v1947, %v1943
        %v1992 = vpack.c.b16 %v1948, %v1944
        %v1993 = vpack.c.b16 %v1949, %v1945
        %v1994 = vpack.c.b16 %v1954, %v1950
        %v1995 = vpack.c.b16 %v1955, %v1951
        %v1996 = vpack.c.b16 %v1956, %v1952
        %v1997 = vpack.c.b16 %v1957, %v1953
        %v1998 = vpack.c.b16 %v1962, %v1958
        %v1999 = vpack.c.b16 %v1963, %v1959
        %v2000 = vpack.c.b16 %v1964, %v1960
        %v2001 = vpack.c.b16 %v1965, %v1961
        %v2002 = vpack.c.b16 %v1970, %v1966
        %v2003 = vpack.c.b16 %v1971, %v1967
        %v2004 = vpack.c.b16 %v1972, %v1968
        %v2005 = vpack.c.b16 %v1973, %v1969
        %2038 = vmatprep.subr.bf16.mxu0 %v1975
        %2039 = vmatpush1.bf16.msra.mxu0 %v1974
        %2040 = vmatprep.subr.bf16.mxu0 %v1979
        %2041 = vmatpush1.bf16.msra.mxu0 %v1978
        %2042 = vmatprep.subr.bf16.mxu0 %v1983
        %2043 = vmatpush1.bf16.msra.mxu0 %v1982
        %2044 = vmatprep.subr.bf16.mxu0 %v1987
        %2045 = vmatpush1.bf16.msra.mxu0 %v1986
        %2046 = vmatprep.subr.bf16.mxu0 %v1991
        %2047 = vmatpush1.bf16.msra.mxu0 %v1990
        %2048 = vmatprep.subr.bf16.mxu0 %v1995
        %2049 = vmatpush1.bf16.msra.mxu0 %v1994
        %2050 = vmatprep.subr.bf16.mxu0 %v1999
        %2051 = vmatpush1.bf16.msra.mxu0 %v1998
        %2052 = vmatprep.subr.bf16.mxu0 %v2003
        %2053 = vmatpush1.bf16.msra.mxu0 %v2002
        %2054 = vmatprep.subr.bf16.mxu0 0
        %2055 = vmatpush1.bf16.msra.mxu0 0
        %2056 = vmatprep.subr.bf16.mxu0 0
        %2057 = vmatpush1.bf16.msra.mxu0 0
        %2058 = vmatprep.subr.bf16.mxu0 0
        %2059 = vmatpush1.bf16.msra.mxu0 0
        %2060 = vmatprep.subr.bf16.mxu0 0
        %2061 = vmatpush1.bf16.msra.mxu0 0
        %2062 = vmatprep.subr.bf16.mxu0 0
        %2063 = vmatpush1.bf16.msra.mxu0 0
        %2064 = vmatprep.subr.bf16.mxu0 0
        %2065 = vmatpush1.bf16.msra.mxu0 0
        %2066 = vmatprep.subr.bf16.mxu0 0
        %2067 = vmatpush1.bf16.msra.mxu0 0
        %2068 = vmatprep.subr.bf16.mxu0 0
        %2069 = vmatpush1.bf16.msra.mxu0 0
        %2070 = vmatprep.mubr.bf16.mxu0 0
        %2071 = vmatmul.mubr.bf16.gmra.mrb[0].mxu0 %v1823
        %v2072 = vpop.f32.mrb[0].mxu0
        %v2073 = vadd.f32 %v1861, %v2072
        %v2074 = vpop.f32.mrb[0].mxu0
        %v2075 = vadd.f32 %v1865, %v2074
        %v2076 = vpop.f32.mrb[0].mxu0
        %v2077 = vpop.f32.mrb[0].mxu0
        %2078 = vdwg.mxu0
        %2079 = vmatprep.subr.bf16.mxu0 %v1977
        %2080 = vmatpush1.bf16.msra.mxu0 %v1976
        %2081 = vmatprep.subr.bf16.mxu0 %v1981
        %2082 = vmatpush1.bf16.msra.mxu0 %v1980
        %2083 = vmatprep.subr.bf16.mxu0 %v1985
        %2084 = vmatpush1.bf16.msra.mxu0 %v1984
        %2085 = vmatprep.subr.bf16.mxu0 %v1989
        %2086 = vmatpush1.bf16.msra.mxu0 %v1988
        %2087 = vmatprep.subr.bf16.mxu0 %v1993
        %2088 = vmatpush1.bf16.msra.mxu0 %v1992
        %2089 = vmatprep.subr.bf16.mxu0 %v1997
        %2090 = vmatpush1.bf16.msra.mxu0 %v1996
        %2091 = vmatprep.subr.bf16.mxu0 %v2001
        %2092 = vmatpush1.bf16.msra.mxu0 %v2000
        %2093 = vmatprep.subr.bf16.mxu0 %v2005
        %2094 = vmatpush1.bf16.msra.mxu0 %v2004
        %2095 = vmatprep.subr.bf16.mxu0 0
        %2096 = vmatpush1.bf16.msra.mxu0 0
        %2097 = vmatprep.subr.bf16.mxu0 0
        %2098 = vmatpush1.bf16.msra.mxu0 0
        %2099 = vmatprep.subr.bf16.mxu0 0
        %2100 = vmatpush1.bf16.msra.mxu0 0
        %2101 = vmatprep.subr.bf16.mxu0 0
        %2102 = vmatpush1.bf16.msra.mxu0 0
        %2103 = vmatprep.subr.bf16.mxu0 0
        %2104 = vmatpush1.bf16.msra.mxu0 0
        %2105 = vmatprep.subr.bf16.mxu0 0
        %2106 = vmatpush1.bf16.msra.mxu0 0
        %2107 = vmatprep.subr.bf16.mxu0 0
        %2108 = vmatpush1.bf16.msra.mxu0 0
        %2109 = vmatprep.subr.bf16.mxu0 0
        %2110 = vmatpush1.bf16.msra.mxu0 0
        %2111 = vmatprep.mubr.bf16.mxu0 0
        %2112 = vmatmul.mubr.bf16.gmra.mrb[0].mxu0 %v1823
        %v2113 = vpop.f32.mrb[0].mxu0
        %v2114 = vadd.f32 %v1869, %v2113
        %v2115 = vpop.f32.mrb[0].mxu0
        %v2116 = vadd.f32 %v1873, %v2115
        %v2117 = vpop.f32.mrb[0].mxu0
        %v2118 = vpop.f32.mrb[0].mxu0
        %2119 = vdwg.mxu0
        %v2120 = vmul.f32 %v2073, 0.5
        %v2121 = vmul.f32 %v2075, 0.5
        %v2122 = vmul.f32 %v2114, 0.5
        %v2123 = vmul.f32 %v2116, 0.5
        %v2124 = vmul.f32 %v2073, 0.044715
        %v2125 = vmul.f32 %v2075, 0.044715
        %v2126 = vmul.f32 %v2114, 0.044715
        %v2127 = vmul.f32 %v2116, 0.044715
        %v2128 = vmul.f32 %v2124, %v2073
        %v2129 = vmul.f32 %v2125, %v2075
        %v2130 = vmul.f32 %v2126, %v2114
        %v2131 = vmul.f32 %v2127, %v2116
        %v2132 = vmul.f32 %v2128, %v2073
        %v2133 = vmul.f32 %v2129, %v2075
        %v2134 = vmul.f32 %v2130, %v2114
        %v2135 = vmul.f32 %v2131, %v2116
        %v2136 = vadd.f32 %v2073, %v2132
        %v2137 = vadd.f32 %v2075, %v2133
        %v2138 = vadd.f32 %v2114, %v2134
        %v2139 = vadd.f32 %v2116, %v2135
        %v2140 = vmul.f32 %v2136, 0.7978846
        %v2141 = vmul.f32 %v2137, 0.7978846
        %v2142 = vmul.f32 %v2138, 0.7978846
        %v2143 = vmul.f32 %v2139, 0.7978846
        %v2144 = vtanh.pop %v2140
        %v2145 = vtanh.pop %v2141
        %v2146 = vtanh.pop %v2142
        %v2147 = vtanh.pop %v2143
        %v2148 = vadd.f32 %v2144, 1.0
        %v2149 = vadd.f32 %v2145, 1.0
        %v2150 = vadd.f32 %v2146, 1.0
        %v2151 = vadd.f32 %v2147, 1.0
        %v2152 = vmul.f32 %v2120, %v2148
        %v2153 = vmul.f32 %v2121, %v2149
        %v2154 = vmul.f32 %v2122, %v2150
        %v2155 = vmul.f32 %v2123, %v2151
        %v2156 = vpack.c.bf16 %v2152, %v2152
        %v2157 = vpack.c.bf16 %v2153, %v2153
        %v2158 = vpack.c.bf16 %v2154, %v2154
        %v2159 = vpack.c.bf16 %v2155, %v2155
        %v2160 = vld [vmem:[%s951] sm:$0xf]
        %v2161 = vld [vmem:[%s951 + $0x4] sm:$0xf]
        %v2162 = vld [vmem:[%s951 + $0x8] sm:$0xf]
        %v2163 = vld [vmem:[%s951 + $0xc] sm:$0xf]
        %v2164 = vld [vmem:[%s951 + $0x10] sm:$0xf]
        %v2165 = vld [vmem:[%s951 + $0x14] sm:$0xf]
        %v2166 = vld [vmem:[%s951 + $0x18] sm:$0xf]
        %v2167 = vld [vmem:[%s951 + $0x1c] sm:$0xf]
        %v2168 = vld [vmem:[%s951 + $0x20] sm:$0xf]
        %v2169 = vld [vmem:[%s951 + $0x24] sm:$0xf]
        %v2170 = vld [vmem:[%s951 + $0x28] sm:$0xf]
        %v2171 = vld [vmem:[%s951 + $0x2c] sm:$0xf]
        %v2172 = vld [vmem:[%s951 + $0x30] sm:$0xf]
        %v2173 = vld [vmem:[%s951 + $0x34] sm:$0xf]
        %v2174 = vld [vmem:[%s951 + $0x38] sm:$0xf]
        %v2175 = vld [vmem:[%s951 + $0x3c] sm:$0xf]
        %v2176 = vld [vmem:[%s951 + $0x40] sm:$0xf]
        %v2177 = vld [vmem:[%s951 + $0x44] sm:$0xf]
        %v2178 = vld [vmem:[%s951 + $0x48] sm:$0xf]
        %v2179 = vld [vmem:[%s951 + $0x4c] sm:$0xf]
        %v2180 = vld [vmem:[%s951 + $0x50] sm:$0xf]
        %v2181 = vld [vmem:[%s951 + $0x54] sm:$0xf]
        %v2182 = vld [vmem:[%s951 + $0x58] sm:$0xf]
        %v2183 = vld [vmem:[%s951 + $0x5c] sm:$0xf]
        %v2184 = vld [vmem:[%s951 + $0x60] sm:$0xf]
        %v2185 = vld [vmem:[%s951 + $0x64] sm:$0xf]
        %v2186 = vld [vmem:[%s951 + $0x68] sm:$0xf]
        %v2187 = vld [vmem:[%s951 + $0x6c] sm:$0xf]
        %v2188 = vld [vmem:[%s951 + $0x70] sm:$0xf]
        %v2189 = vld [vmem:[%s951 + $0x74] sm:$0xf]
        %v2190 = vld [vmem:[%s951 + $0x78] sm:$0xf]
        %v2191 = vld [vmem:[%s951 + $0x7c] sm:$0xf]
        %v2192 = vld [vmem:[%s951 + $0x80] sm:$0xf]
        %v2193 = vld [vmem:[%s951 + $0x84] sm:$0xf]
        %v2194 = vld [vmem:[%s951 + $0x88] sm:$0xf]
        %v2195 = vld [vmem:[%s951 + $0x8c] sm:$0xf]
        %v2196 = vld [vmem:[%s951 + $0x90] sm:$0xf]
        %v2197 = vld [vmem:[%s951 + $0x94] sm:$0xf]
        %v2198 = vld [vmem:[%s951 + $0x98] sm:$0xf]
        %v2199 = vld [vmem:[%s951 + $0x9c] sm:$0xf]
        %v2200 = vld [vmem:[%s951 + $0xa0] sm:$0xf]
        %v2201 = vld [vmem:[%s951 + $0xa4] sm:$0xf]
        %v2202 = vld [vmem:[%s951 + $0xa8] sm:$0xf]
        %v2203 = vld [vmem:[%s951 + $0xac] sm:$0xf]
        %v2204 = vld [vmem:[%s951 + $0xb0] sm:$0xf]
        %v2205 = vld [vmem:[%s951 + $0xb4] sm:$0xf]
        %v2206 = vld [vmem:[%s951 + $0xb8] sm:$0xf]
        %v2207 = vld [vmem:[%s951 + $0xbc] sm:$0xf]
        %v2208 = vld [vmem:[%s951 + $0xc0] sm:$0xf]
        %v2209 = vld [vmem:[%s951 + $0xc4] sm:$0xf]
        %v2210 = vld [vmem:[%s951 + $0xc8] sm:$0xf]
        %v2211 = vld [vmem:[%s951 + $0xcc] sm:$0xf]
        %v2212 = vld [vmem:[%s951 + $0xd0] sm:$0xf]
        %v2213 = vld [vmem:[%s951 + $0xd4] sm:$0xf]
        %v2214 = vld [vmem:[%s951 + $0xd8] sm:$0xf]
        %v2215 = vld [vmem:[%s951 + $0xdc] sm:$0xf]
        %v2216 = vld [vmem:[%s951 + $0xe0] sm:$0xf]
        %v2217 = vld [vmem:[%s951 + $0xe4] sm:$0xf]
        %v2218 = vld [vmem:[%s951 + $0xe8] sm:$0xf]
        %v2219 = vld [vmem:[%s951 + $0xec] sm:$0xf]
        %v2220 = vld [vmem:[%s951 + $0xf0] sm:$0xf]
        %v2221 = vld [vmem:[%s951 + $0xf4] sm:$0xf]
        %v2222 = vld [vmem:[%s951 + $0xf8] sm:$0xf]
        %v2223 = vld [vmem:[%s951 + $0xfc] sm:$0xf]
        %v2224 = vld [vmem:[%s1118] sm:$0x1]
        %v2226 = vlaneseq
        %v2227 = vshrl.u32 %v2226, 7
        %v2228 = vsub.s32 0, %v2227
        %v2229 = vrot.slane %v2224, %v2228
        %v2295 = vunpack.c.l.b16 %v2160
        %v2296 = vunpack.c.l.b16 %v2161
        %v2297 = vunpack.c.l.b16 %v2162
        %v2298 = vunpack.c.l.b16 %v2163
        %v2299 = vunpack.c.l.b16 %v2164
        %v2300 = vunpack.c.l.b16 %v2165
        %v2301 = vunpack.c.l.b16 %v2166
        %v2302 = vunpack.c.l.b16 %v2167
        %v2303 = vunpack.c.l.b16 %v2168
        %v2304 = vunpack.c.l.b16 %v2169
        %v2305 = vunpack.c.l.b16 %v2170
        %v2306 = vunpack.c.l.b16 %v2171
        %v2307 = vunpack.c.l.b16 %v2172
        %v2308 = vunpack.c.l.b16 %v2173
        %v2309 = vunpack.c.l.b16 %v2174
        %v2310 = vunpack.c.l.b16 %v2175
        %v2311 = vunpack.c.l.b16 %v2176
        %v2312 = vunpack.c.l.b16 %v2177
        %v2313 = vunpack.c.l.b16 %v2178
        %v2314 = vunpack.c.l.b16 %v2179
        %v2315 = vunpack.c.l.b16 %v2180
        %v2316 = vunpack.c.l.b16 %v2181
        %v2317 = vunpack.c.l.b16 %v2182
        %v2318 = vunpack.c.l.b16 %v2183
        %v2319 = vunpack.c.l.b16 %v2184
        %v2320 = vunpack.c.l.b16 %v2185
        %v2321 = vunpack.c.l.b16 %v2186
        %v2322 = vunpack.c.l.b16 %v2187
        %v2323 = vunpack.c.l.b16 %v2188
        %v2324 = vunpack.c.l.b16 %v2189
        %v2325 = vunpack.c.l.b16 %v2190
        %v2326 = vunpack.c.l.b16 %v2191
        %v2327 = vunpack.c.l.b16 %v2192
        %v2328 = vunpack.c.l.b16 %v2193
        %v2329 = vunpack.c.l.b16 %v2194
        %v2330 = vunpack.c.l.b16 %v2195
        %v2331 = vunpack.c.l.b16 %v2196
        %v2332 = vunpack.c.l.b16 %v2197
        %v2333 = vunpack.c.l.b16 %v2198
        %v2334 = vunpack.c.l.b16 %v2199
        %v2335 = vunpack.c.l.b16 %v2200
        %v2336 = vunpack.c.l.b16 %v2201
        %v2337 = vunpack.c.l.b16 %v2202
        %v2338 = vunpack.c.l.b16 %v2203
        %v2339 = vunpack.c.l.b16 %v2204
        %v2340 = vunpack.c.l.b16 %v2205
        %v2341 = vunpack.c.l.b16 %v2206
        %v2342 = vunpack.c.l.b16 %v2207
        %v2343 = vunpack.c.l.b16 %v2208
        %v2344 = vunpack.c.l.b16 %v2209
        %v2345 = vunpack.c.l.b16 %v2210
        %v2346 = vunpack.c.l.b16 %v2211
        %v2347 = vunpack.c.l.b16 %v2212
        %v2348 = vunpack.c.l.b16 %v2213
        %v2349 = vunpack.c.l.b16 %v2214
        %v2350 = vunpack.c.l.b16 %v2215
        %v2351 = vunpack.c.l.b16 %v2216
        %v2352 = vunpack.c.l.b16 %v2217
        %v2353 = vunpack.c.l.b16 %v2218
        %v2354 = vunpack.c.l.b16 %v2219
        %v2355 = vunpack.c.l.b16 %v2220
        %v2356 = vunpack.c.l.b16 %v2221
        %v2357 = vunpack.c.l.b16 %v2222
        %v2358 = vunpack.c.l.b16 %v2223
        %v2359 = vpack.c.b16 %v2296, %v2295
        %v2360 = vpack.c.b16 %v2298, %v2297
        %v2361 = vpack.c.b16 %v2300, %v2299
        %v2362 = vpack.c.b16 %v2302, %v2301
        %v2363 = vpack.c.b16 %v2304, %v2303
        %v2364 = vpack.c.b16 %v2306, %v2305
        %v2365 = vpack.c.b16 %v2308, %v2307
        %v2366 = vpack.c.b16 %v2310, %v2309
        %v2367 = vpack.c.b16 %v2312, %v2311
        %v2368 = vpack.c.b16 %v2314, %v2313
        %v2369 = vpack.c.b16 %v2316, %v2315
        %v2370 = vpack.c.b16 %v2318, %v2317
        %v2371 = vpack.c.b16 %v2320, %v2319
        %v2372 = vpack.c.b16 %v2322, %v2321
        %v2373 = vpack.c.b16 %v2324, %v2323
        %v2374 = vpack.c.b16 %v2326, %v2325
        %v2375 = vpack.c.b16 %v2328, %v2327
        %v2376 = vpack.c.b16 %v2330, %v2329
        %v2377 = vpack.c.b16 %v2332, %v2331
        %v2378 = vpack.c.b16 %v2334, %v2333
        %v2379 = vpack.c.b16 %v2336, %v2335
        %v2380 = vpack.c.b16 %v2338, %v2337
        %v2381 = vpack.c.b16 %v2340, %v2339
        %v2382 = vpack.c.b16 %v2342, %v2341
        %v2383 = vpack.c.b16 %v2344, %v2343
        %v2384 = vpack.c.b16 %v2346, %v2345
        %v2385 = vpack.c.b16 %v2348, %v2347
        %v2386 = vpack.c.b16 %v2350, %v2349
        %v2387 = vpack.c.b16 %v2352, %v2351
        %v2388 = vpack.c.b16 %v2354, %v2353
        %v2389 = vpack.c.b16 %v2356, %v2355
        %v2390 = vpack.c.b16 %v2358, %v2357
        %2423 = vmatprep.subr.bf16.mxu0 0
        %2424 = vmatpush1.bf16.msra.mxu0 %v2359
        %2425 = vmatprep.subr.bf16.mxu0 0
        %2426 = vmatpush1.bf16.msra.mxu0 %v2360
        %2427 = vmatprep.subr.bf16.mxu0 0
        %2428 = vmatpush1.bf16.msra.mxu0 %v2361
        %2429 = vmatprep.subr.bf16.mxu0 0
        %2430 = vmatpush1.bf16.msra.mxu0 %v2362
        %2431 = vmatprep.subr.bf16.mxu0 0
        %2432 = vmatpush1.bf16.msra.mxu0 %v2363
        %2433 = vmatprep.subr.bf16.mxu0 0
        %2434 = vmatpush1.bf16.msra.mxu0 %v2364
        %2435 = vmatprep.subr.bf16.mxu0 0
        %2436 = vmatpush1.bf16.msra.mxu0 %v2365
        %2437 = vmatprep.subr.bf16.mxu0 0
        %2438 = vmatpush1.bf16.msra.mxu0 %v2366
        %2439 = vmatprep.subr.bf16.mxu0 0
        %2440 = vmatpush1.bf16.msra.mxu0 %v2367
        %2441 = vmatprep.subr.bf16.mxu0 0
        %2442 = vmatpush1.bf16.msra.mxu0 %v2368
        %2443 = vmatprep.subr.bf16.mxu0 0
        %2444 = vmatpush1.bf16.msra.mxu0 %v2369
        %2445 = vmatprep.subr.bf16.mxu0 0
        %2446 = vmatpush1.bf16.msra.mxu0 %v2370
        %2447 = vmatprep.subr.bf16.mxu0 0
        %2448 = vmatpush1.bf16.msra.mxu0 %v2371
        %2449 = vmatprep.subr.bf16.mxu0 0
        %2450 = vmatpush1.bf16.msra.mxu0 %v2372
        %2451 = vmatprep.subr.bf16.mxu0 0
        %2452 = vmatpush1.bf16.msra.mxu0 %v2373
        %2453 = vmatprep.subr.bf16.mxu0 0
        %2454 = vmatpush1.bf16.msra.mxu0 %v2374
        %2455 = vmatprep.mubr.bf16.mxu0 %v2157
        %2456 = vmatmul.mubr.bf16.gmra.mrb[0].mxu0 %v2156
        %v2457 = vpop.f32.mrb[0].mxu0
        %v2458 = vadd.f32 %v2229, %v2457
        %v2459 = vpop.f32.mrb[0].mxu0
        %v2460 = vpop.f32.mrb[0].mxu0
        %v2461 = vpop.f32.mrb[0].mxu0
        %2462 = vdwg.mxu0
        %2463 = vmatprep.subr.bf16.mxu0 0
        %2464 = vmatpush1.bf16.msra.mxu0 %v2375
        %2465 = vmatprep.subr.bf16.mxu0 0
        %2466 = vmatpush1.bf16.msra.mxu0 %v2376
        %2467 = vmatprep.subr.bf16.mxu0 0
        %2468 = vmatpush1.bf16.msra.mxu0 %v2377
        %2469 = vmatprep.subr.bf16.mxu0 0
        %2470 = vmatpush1.bf16.msra.mxu0 %v2378
        %2471 = vmatprep.subr.bf16.mxu0 0
        %2472 = vmatpush1.bf16.msra.mxu0 %v2379
        %2473 = vmatprep.subr.bf16.mxu0 0
        %2474 = vmatpush1.bf16.msra.mxu0 %v2380
        %2475 = vmatprep.subr.bf16.mxu0 0
        %2476 = vmatpush1.bf16.msra.mxu0 %v2381
        %2477 = vmatprep.subr.bf16.mxu0 0
        %2478 = vmatpush1.bf16.msra.mxu0 %v2382
        %2479 = vmatprep.subr.bf16.mxu0 0
        %2480 = vmatpush1.bf16.msra.mxu0 %v2383
        %2481 = vmatprep.subr.bf16.mxu0 0
        %2482 = vmatpush1.bf16.msra.mxu0 %v2384
        %2483 = vmatprep.subr.bf16.mxu0 0
        %2484 = vmatpush1.bf16.msra.mxu0 %v2385
        %2485 = vmatprep.subr.bf16.mxu0 0
        %2486 = vmatpush1.bf16.msra.mxu0 %v2386
        %2487 = vmatprep.subr.bf16.mxu0 0
        %2488 = vmatpush1.bf16.msra.mxu0 %v2387
        %2489 = vmatprep.subr.bf16.mxu0 0
        %2490 = vmatpush1.bf16.msra.mxu0 %v2388
        %2491 = vmatprep.subr.bf16.mxu0 0
        %2492 = vmatpush1.bf16.msra.mxu0 %v2389
        %2493 = vmatprep.subr.bf16.mxu0 0
        %2494 = vmatpush1.bf16.msra.mxu0 %v2390
        %2495 = vmatprep.mubr.bf16.mxu0 %v2159
        %2496 = vmatmul.mubr.bf16.gmra.mrb[0].mxu0 %v2158
        %v2497 = vpop.f32.mrb[0].mxu0
        %v2498 = vadd.f32 %v2458, %v2497
        %v2499 = vpop.f32.mrb[0].mxu0
        %v2500 = vpop.f32.mrb[0].mxu0
        %v2501 = vpop.f32.mrb[0].mxu0
        %2502 = vdwg.mxu0
        %v2503 = vadd.f32 %v1128, %v2498
        %2504 = vst [vmem:[%s1074] sm:$0xff] %v2503
        %v2505 = vld [vmem:[%s20] sm:$0x1]
        %v2506 = vld [vmem:[%s21] sm:$0x1]
        %v2507 = vsel %vm1158, %v1806, 0.0
        %2508 = vadd.xlane.f32.xlu0 %v2507
        %v2509 = vpop.xlane.xlu0 %2508
        %v2510 = vmul.f32 %v2509, %v1134
        %v2511 = vsub.f32 %v1806, %v2510
        %v2512 = vmul.f32 %v2511, %v2511
        %v2513 = vsel %vm1158, %v2512, 0.0
        %2514 = vadd.xlane.f32.xlu0 %v2513
        %v2515 = vpop.xlane.xlu0 %2514
        %v2516 = vmul.f32 %v2515, %v1134
        %v2517 = vadd.f32 %v2516, 1e-06
        %v2518 = vrsqrt.pop %v2517
        %v2519 = vmul.f32 %v2511, %v2518
        %v2520 = vmul.f32 %v2519, %v2505
        %v2521 = vadd.f32 %v2520, %v2506
        %p2522 = scmp.eq.s32.totalorder %s58, 2
        %s2523 = scalar_select %p2522, 1, 0
        %v2524 = vstv %s2523
        %vm2525 = vcmp.eq.s32.totalorder %v2524, 1
        %v2526 = vsel %vm2525, %v2521, %v1806
        %2527 = vst [vmem:[%s1080] sm:$0x1] %v2526
        %s2528 = sand.u32 %s625, 1
        %s2529 = scalar_lea.sflag [#allocation4], %s2528
        %s2530 = sand.u32 %s625, 1
        %s2531 = smul.addr %s2530, 8
        %s2532 = scalar_lea.vmem [#allocation13], %s2531
        %s2533 = sand.u32 %s651, 1
        %s2534 = scalar_lea.sflag [#allocation15], %s2533
        %s2535 = sand.u32 %s651, 1
        %s2536 = scalar_lea.vmem [#allocation14], %s2535
        // Predicated region
        $region137: #{tpu_custom_call.1} parent=107 // pred_check
          %p2537 = pneg %p635
        $region138: #{tpu_custom_call.1} parent=107 // pred_check_branch
          %2539 = sbr.rel (%p2537) target = $region140
        $region139: #{tpu_custom_call.1} parent=107 // pred_region
          %s2541 = ssub.s32 128, 128
          %2542 = vsyncadd %s2529, %s2541
          %s2543 = smul.addr %s57, 128
          %s2544 = scalar_lea.hbm %s22, %s2543
          %s2546 = sshll.u32 %s2532, 4
          %s2547 = int_to_ptr.vmem [resolvable:$true] %s2546
          %2549 = dma.vmem_to_hbm [thread:$0]  %s2547, 128, %s2544, %s2529
        $region140: #{tpu_custom_call.1} parent=107 // pred_fallthru
          _
        // Predicated region
        $region141: #{tpu_custom_call.1} parent=107 // pred_check
          %p2550 = pneg %p661
        $region142: #{tpu_custom_call.1} parent=107 // pred_check_branch
          %2552 = sbr.rel (%p2550) target = $region144
        $region143: #{tpu_custom_call.1} parent=107 // pred_region
          %s2554 = ssub.s32 16, 16
          %2555 = vsyncadd %s2534, %s2554
          %s2556 = smul.addr %s57, 16
          %s2557 = scalar_lea.hbm %s23, %s2556
          %s2559 = sshll.u32 %s2536, 4
          %s2560 = int_to_ptr.vmem [resolvable:$true] %s2559
          %2562 = dma.vmem_to_hbm [thread:$0]  %s2560, 16, %s2557, %s2534
        $region144: #{tpu_custom_call.1} parent=107 // pred_fallthru
          _
      $region108: #{tpu_custom_call.1} parent=5 // pred_fallthru
        _
      %p2563 = scmp.le.s32.totalorder 2, %s48
      // Predicated region
      $region145: #{tpu_custom_call.1} parent=5 // pred_check
        %p2564 = pneg %p2563
      $region146: #{tpu_custom_call.1} parent=5 // pred_check_branch
        %2566 = sbr.rel (%p2564) target = $region148
      $region147: #{tpu_custom_call.1} parent=5 // pred_region
        %s2567 = ssub.s32 %s48, 2
        // Predicated region
        $region149: #{tpu_custom_call.1} parent=147 // pred_check
          %p2568 = pneg %p641
        $region150: #{tpu_custom_call.1} parent=147 // pred_check_branch
          %2570 = sbr.rel (%p2568) target = $region152
        $region151: #{tpu_custom_call.1} parent=147 // pred_region
          %s2571 = sand.u32 %s626, 1
          %s2572 = scalar_lea.sflag [#allocation4], %s2571
          %s2573 = sand.u32 %s626, 1
          %s2574 = smul.addr %s2573, 8
          %s2575 = scalar_lea.vmem [#allocation13], %s2574
          %2576 = dma.done %s2572, 128
        $region152: #{tpu_custom_call.1} parent=147 // pred_fallthru
          _
        // Predicated region
        $region153: #{tpu_custom_call.1} parent=147 // pred_check
          %p2577 = pneg %p667
        $region154: #{tpu_custom_call.1} parent=147 // pred_check_branch
          %2579 = sbr.rel (%p2577) target = $region156
        $region155: #{tpu_custom_call.1} parent=147 // pred_region
          %s2580 = sand.u32 %s652, 1
          %s2581 = scalar_lea.sflag [#allocation15], %s2580
          %s2582 = sand.u32 %s652, 1
          %s2583 = scalar_lea.vmem [#allocation14], %s2582
          %2584 = dma.done %s2581, 16
        $region156: #{tpu_custom_call.1} parent=147 // pred_fallthru
          _
      $region148: #{tpu_custom_call.1} parent=5 // pred_fallthru
        _
    $region6: #{tpu_custom_call.1} parent=1 // loop_footer
      %s52 = sadd.s32 1, %s48
    $region7: #{tpu_custom_call.1} parent=1 // loop_footer_branch
      %47 = sbr.rel target = $region3
    $region8: #{tpu_custom_call.1} parent=1 // loop_exit
      _
    %2585 = vsyncpa [#allocation3], 1
    %s2586 = scalar_lea.sflag [#allocation3], 1
    %2587 = vsyncpa %s2586, 1
    %2588 = vsyncpa [#allocation6], 1
    %s2589 = scalar_lea.sflag [#allocation6], 1
    %2590 = vsyncpa %s2589, 1
    %2591 = vsyncpa [#allocation9], 1
    %s2592 = scalar_lea.sflag [#allocation9], 1
    %2593 = vsyncpa %s2592, 1
    %2594 = vsyncpa [#allocation12], 1
    %s2595 = scalar_lea.sflag [#allocation12], 1
    %2596 = vsyncpa %s2595, 1
    %2597 = vsyncpa [#allocation4], 1
    %s2598 = scalar_lea.sflag [#allocation4], 1
    %2599 = vsyncpa %s2598, 1
    %2600 = vsyncpa [#allocation15], 1
    %s2601 = scalar_lea.sflag [#allocation15], 1
    %2602 = vsyncpa %s2601, 1

</llo_original>
